<compile_context>
chip_gen: v6e
topology: v6e:2x2x1
jax: 0.10.0
libtpu: 0.0.40
codegen_flags: <defaults>
</compile_context>

<pallas_src>
import functools

import jax
import jax.numpy as jnp
from jax.experimental import pallas as pl
from jax.experimental.pallas import tpu as pltpu

K = 7   # conv kernel size
P = 3   # padding


def _sa_kernel(x_ref, col_ref, row_ref, w_ref, b_ref, o_ref, sum_ref, max_ref,
               *, c_total, ct, height, width, nbi):
    # x_ref:   (nb, ct, HW)  VMEM, native dtype (one batch block / channel tile)
    # col_ref: (1, HW)       VMEM int32, j = flat_index % W
    # row_ref: (1, HW)       VMEM int32, i = flat_index // W
    # w_ref:   (2*K*K,)      SMEM f32, conv weight flattened as [c, ki, kj]
    # b_ref:   (1,)          SMEM f32, conv bias
    # o_ref:   (nb, 1, HW)   VMEM, lane-dense output block
    # sum_ref: (nb, HW)      VMEM f32 scratch (channel-sum accumulator)
    # max_ref: (nb, HW)      VMEM f32 scratch (channel-max accumulator)
    nb = x_ref.shape[0]
    hw = height * width
    k = pl.program_id(1)

    # ------------- phase 1: fused channel sum + max (lane-dense) -------------
    @pl.when(k == 0)
    def _():
        sum_ref[...] = jnp.zeros(sum_ref.shape, jnp.float32)
        max_ref[...] = jnp.full(max_ref.shape, -jnp.inf, jnp.float32)

    for n0 in range(0, nb, nbi):
        s = x_ref[n0:n0 + nbi, 0, :].astype(jnp.float32)
        m = s
        for c in range(1, ct):
            xc = x_ref[n0:n0 + nbi, c, :].astype(jnp.float32)
            s = s + xc
            m = jnp.maximum(m, xc)
        sum_ref[n0:n0 + nbi, :] = sum_ref[n0:n0 + nbi, :] + s
        max_ref[n0:n0 + nbi, :] = jnp.maximum(max_ref[n0:n0 + nbi, :], m)

    # --------- phase 2: 7x7 conv + sigmoid on the last channel step ---------
    @pl.when(k == pl.num_programs(1) - 1)
    def _():
        inv_c = 1.0 / c_total
        bias = b_ref[0]
        # Weight scalars are loop invariant: read them once per grid step,
        # outside the batch sub-chunk loop.
        wv = [w_ref[i] for i in range(2 * K * K)]
        col = col_ref[...]
        row = row_ref[...]

        for n0 in range(0, nb, nbi):
            avg = sum_ref[n0:n0 + nbi, :] * inv_c
            mxp = max_ref[n0:n0 + nbi, :]
            planes = (avg, mxp)

            # Hoisted dj (column) shifts: 7 column-masked copies per channel.
            # slab[c][dj][q] == feat_c[q + (dj - P)]  (0 outside the image row)
            slabs = []
            for c in range(2):
                per_dj = []
                for dj in range(K):
                    sft = dj - P
                    v = planes[c]
                    if sft != 0:
                        v = pltpu.roll(v, shift=(-sft) % hw, axis=1)
                        if sft > 0:
                            v = jnp.where(col < (width - sft), v, 0.0)
                        else:
                            v = jnp.where(col >= (-sft), v, 0.0)
                    per_dj.append(v)
                slabs.append(per_dj)

            # 98 FMAs grouped per row offset di; a single roll + one row mask
            # per di moves each partial sum into place (18 rolls total).
            acc = None
            for di in range(K):
                t = di - P
                p0 = None
                p1 = None
                q = 0
                for c in range(2):
                    for dj in range(K):
                        term = wv[c * K * K + di * K + dj] * slabs[c][dj]
                        if q % 2 == 0:
                            p0 = term if p0 is None else p0 + term
                        else:
                            p1 = term if p1 is None else p1 + term
                        q += 1
                s_di = p0 + p1
                if t != 0:
                    s_di = pltpu.roll(s_di, shift=(-t * width) % hw, axis=1)
                    if t > 0:
                        s_di = jnp.where(row < (height - t), s_di, 0.0)
                    else:
                        s_di = jnp.where(row >= (-t), s_di, 0.0)
                acc = s_di if acc is None else acc + s_di

            out = jax.nn.sigmoid(acc + bias)
            # Lane-dense store: HW (=256 here) lanes, unmasked vst.
            o_ref[n0:n0 + nbi, 0, :] = out.astype(o_ref.dtype)


def _largest_divisor_leq(n, cap):
    best = 1
    for d in range(1, min(n, cap) + 1):
        if n % d == 0:
            best = d
    return best


def spatial_attention(x, weight, bias):
    """x: (N, C, H, W); weight: (1, 2, 7, 7) f32; bias: (1,) f32."""
    N, C, H, W = x.shape
    HW = H * W
    x_flat = x.reshape(N, C, HW)                        # native dtype, no copy
    w_flat = weight.reshape(-1).astype(jnp.float32)     # (2*K*K,)
    b = bias.reshape(-1).astype(jnp.float32)            # (1,)

    # Flat-pixel coordinate maps (computed host-side; avoids in-kernel idiv).
    idx = jnp.arange(HW, dtype=jnp.int32)
    col = (idx % W).reshape(1, HW)
    row = (idx // W).reshape(1, HW)

    # Channel tile (reduction grid axis): full C if small, else a multiple of
    # 8 (second-minor blocking rule) no larger than 32.
    if C <= 32:
        ct = C
    else:
        ct = C
        for d in range(8, 33, 8):
            if C % d == 0:
                ct = d

    # Batch block from an ~8 MiB budget; split so the grid has >= 2 steps when
    # possible (pipelining + both v7x TensorCores get work).
    per_sample = ct * HW * x.dtype.itemsize
    nb_cap = max(1, min(64, (8 * 1024 * 1024) // max(per_sample, 1)))
    nb = _largest_divisor_leq(N, nb_cap)
    if N // nb < 2 and nb > 1:
        nb = _largest_divisor_leq(N, max(1, nb // 2))
    nbi = _largest_divisor_leq(nb, 8)                   # conv sub-chunk size

    grid = (N // nb, C // ct)

    kernel = functools.partial(
        _sa_kernel, c_total=C, ct=ct, height=H, width=W, nbi=nbi)

    cost = pl.CostEstimate(
        flops=int(N * HW * (2 * C + 4 * K * K + 2)),
        transcendentals=int(N * HW),
        bytes_accessed=int(x.size * x.dtype.itemsize
                           + N * HW * x.dtype.itemsize
                           + (2 * K * K + 1) * 4),
    )

    out_flat = pl.pallas_call(
        kernel,
        out_shape=jax.ShapeDtypeStruct((N, 1, HW), x.dtype),
        grid_spec=pltpu.PrefetchScalarGridSpec(
            num_scalar_prefetch=0,
            grid=grid,
            in_specs=[
                pl.BlockSpec((nb, ct, HW), lambda i, k: (i, k, 0)),
                pl.BlockSpec((1, HW), lambda i, k: (0, 0)),
                pl.BlockSpec((1, HW), lambda i, k: (0, 0)),
                pl.BlockSpec(memory_space=pltpu.MemorySpace.SMEM),
                pl.BlockSpec(memory_space=pltpu.MemorySpace.SMEM),
            ],
            out_specs=pl.BlockSpec((nb, 1, HW), lambda i, k: (i, 0, 0)),
            scratch_shapes=[pltpu.VMEM((nb, HW), jnp.float32),
                            pltpu.VMEM((nb, HW), jnp.float32)],
        ),
        compiler_params=pltpu.CompilerParams(
            dimension_semantics=("parallel", "arbitrary"),
            vmem_limit_bytes=48 * 1024 * 1024,
        ),
        cost_estimate=cost,
    )(x_flat, col, row, w_flat, b)

    return out_flat.reshape(N, 1, H, W)


def reference(x, weight, bias):
    avg = jnp.mean(x, axis=1, keepdims=True)
    mx = jnp.max(x, axis=1, keepdims=True)
    feat = jnp.concatenate([avg, mx], axis=1)
    out = jax.lax.conv_general_dilated(
        feat, weight,
        window_strides=(1, 1),
        padding=((P, P), (P, P)),
        dimension_numbers=("NCHW", "OIHW", "NCHW"),
    ) + bias.reshape(1, 1, 1, 1)
    return jax.nn.sigmoid(out)


if __name__ == "__main__":
    key = jax.random.PRNGKey(0)
    kx, kw, kb = jax.random.split(key, 3)

    N, C, H, W = 2, 4, 16, 16
    x = jax.random.normal(kx, (N, C, H, W), dtype=jnp.float32)

    # deterministic parameter init (synthetic, not a checkpoint)
    weight = jax.random.normal(kw, (1, 2, K, K), dtype=jnp.float32) * 0.1
    bias = jax.random.normal(kb, (1,), dtype=jnp.float32) * 0.1

    out = spatial_attention(x, weight, bias)
    out = jax.block_until_ready(out)

    ref = reference(x, weight, bias)
    assert out.shape == (N, 1, H, W)
    err = jnp.max(jnp.abs(out - ref))
    assert jnp.allclose(out, ref, rtol=1e-5, atol=1e-5), f"max abs err {err}"

    print("KERNEL_OK")
</pallas_src>

<mosaic_0001>
module attributes {stable_mosaic.version = 11 : i64} {
  func.func @_sa_kernel(%arg0: i32, %arg1: i32, %arg2: memref<1x4x256xf32, #tpu.memory_space<vmem>>, %arg3: memref<1x256xi32, #tpu.memory_space<vmem>>, %arg4: memref<1x256xi32, #tpu.memory_space<vmem>>, %arg5: memref<98xf32, #tpu.memory_space<smem>>, %arg6: memref<1xf32, #tpu.memory_space<smem>>, %arg7: memref<1x1x256xf32, #tpu.memory_space<vmem>>, %arg8: memref<1x256xf32, #tpu.memory_space<vmem>>, %arg9: memref<1x256xf32, #tpu.memory_space<vmem>>) attributes {dimension_semantics = [#tpu.dimension_semantics<parallel>, #tpu.dimension_semantics<arbitrary>], iteration_bounds = array<i64: 2, 1>, scalar_prefetch = 0 : i64, scratch_operands = 2 : i64, tpu.core_type = #tpu.core_type<tc>, window_params = [{transform_indices = @transform_0, window_bounds = array<i64: 1, 4, 256>}, {pipeline_mode = #tpu.pipeline_mode<synchronous>, transform_indices = @transform_1, window_bounds = array<i64: 1, 256>}, {pipeline_mode = #tpu.pipeline_mode<synchronous>, transform_indices = @transform_2, window_bounds = array<i64: 1, 256>}, {transform_indices = @transform_3, window_bounds = array<i64: 98>}, {transform_indices = @transform_4, window_bounds = array<i64: 1>}, {transform_indices = @transform_5, window_bounds = array<i64: 1, 1, 256>}]} {
    %c0_i32 = arith.constant 0 : i32
    %0 = arith.cmpi eq, %arg1, %c0_i32 : i32
    %1 = arith.extui %0 : i1 to i32
    %c0_i32_0 = arith.constant 0 : i32
    %2 = arith.cmpi ne, %1, %c0_i32_0 : i32
    scf.if %2 {
      %cst = arith.constant 0.000000e+00 : f32
      %26 = vector.broadcast %cst : f32 to vector<1x256xf32>
      %c0_19 = arith.constant 0 : index
      %c0_20 = arith.constant 0 : index
      %27 = vector.load %arg8[%c0_19, %c0_20] : memref<1x256xf32, #tpu.memory_space<vmem>>, vector<1x256xf32>
      tpu.vector_store %arg8[%c0_19, %c0_20], %26 {strides = array<i32>} : memref<1x256xf32, #tpu.memory_space<vmem>>, vector<1x256xf32>,
      %cst_21 = arith.constant 0xFF800000 : f32
      %28 = vector.broadcast %cst_21 : f32 to vector<1x256xf32>
      %c0_22 = arith.constant 0 : index
      %c0_23 = arith.constant 0 : index
      %29 = vector.load %arg9[%c0_22, %c0_23] : memref<1x256xf32, #tpu.memory_space<vmem>>, vector<1x256xf32>
      tpu.vector_store %arg9[%c0_22, %c0_23], %28 {strides = array<i32>} : memref<1x256xf32, #tpu.memory_space<vmem>>, vector<1x256xf32>,
    } else {
    }
    %c0 = arith.constant 0 : index
    %c0_1 = arith.constant 0 : index
    %c0_2 = arith.constant 0 : index
    %3 = vector.load %arg2[%c0, %c0_1, %c0_2] : memref<1x4x256xf32, #tpu.memory_space<vmem>>, vector<1x1x256xf32>
    %4 = vector.shape_cast %3 : vector<1x1x256xf32> to vector<1x256xf32>
    %c0_3 = arith.constant 0 : index
    %c1 = arith.constant 1 : index
    %c0_4 = arith.constant 0 : index
    %5 = vector.load %arg2[%c0_3, %c1, %c0_4] : memref<1x4x256xf32, #tpu.memory_space<vmem>>, vector<1x1x256xf32>
    %6 = vector.shape_cast %5 : vector<1x1x256xf32> to vector<1x256xf32>
    %7 = arith.addf %4, %6 : vector<1x256xf32>
    %8 = arith.maximumf %4, %6 : vector<1x256xf32>
    %c0_5 = arith.constant 0 : index
    %c2 = arith.constant 2 : index
    %c0_6 = arith.constant 0 : index
    %9 = vector.load %arg2[%c0_5, %c2, %c0_6] : memref<1x4x256xf32, #tpu.memory_space<vmem>>, vector<1x1x256xf32>
    %10 = vector.shape_cast %9 : vector<1x1x256xf32> to vector<1x256xf32>
    %11 = arith.addf %7, %10 : vector<1x256xf32>
    %12 = arith.maximumf %8, %10 : vector<1x256xf32>
    %c0_7 = arith.constant 0 : index
    %c3 = arith.constant 3 : index
    %c0_8 = arith.constant 0 : index
    %13 = vector.load %arg2[%c0_7, %c3, %c0_8] : memref<1x4x256xf32, #tpu.memory_space<vmem>>, vector<1x1x256xf32>
    %14 = vector.shape_cast %13 : vector<1x1x256xf32> to vector<1x256xf32>
    %15 = arith.addf %11, %14 : vector<1x256xf32>
    %16 = arith.maximumf %12, %14 : vector<1x256xf32>
    %c0_9 = arith.constant 0 : index
    %c0_10 = arith.constant 0 : index
    %17 = vector.load %arg8[%c0_9, %c0_10] : memref<1x256xf32, #tpu.memory_space<vmem>>, vector<1x256xf32>
    %18 = arith.addf %17, %15 : vector<1x256xf32>
    %c0_11 = arith.constant 0 : index
    %c0_12 = arith.constant 0 : index
    %19 = vector.load %arg8[%c0_11, %c0_12] : memref<1x256xf32, #tpu.memory_space<vmem>>, vector<1x256xf32>
    tpu.vector_store %arg8[%c0_11, %c0_12], %18 {strides = array<i32>} : memref<1x256xf32, #tpu.memory_space<vmem>>, vector<1x256xf32>,
    %c0_13 = arith.constant 0 : index
    %c0_14 = arith.constant 0 : index
    %20 = vector.load %arg9[%c0_13, %c0_14] : memref<1x256xf32, #tpu.memory_space<vmem>>, vector<1x256xf32>
    %21 = arith.maximumf %20, %16 : vector<1x256xf32>
    %c0_15 = arith.constant 0 : index
    %c0_16 = arith.constant 0 : index
    %22 = vector.load %arg9[%c0_15, %c0_16] : memref<1x256xf32, #tpu.memory_space<vmem>>, vector<1x256xf32>
    tpu.vector_store %arg9[%c0_15, %c0_16], %21 {strides = array<i32>} : memref<1x256xf32, #tpu.memory_space<vmem>>, vector<1x256xf32>,
    %c0_i32_17 = arith.constant 0 : i32
    %23 = arith.cmpi eq, %arg1, %c0_i32_17 : i32
    %24 = arith.extui %23 : i1 to i32
    %c0_i32_18 = arith.constant 0 : i32
    %25 = arith.cmpi ne, %24, %c0_i32_18 : i32
    scf.if %25 {
      %c0_19 = arith.constant 0 : index
      %26 = memref.load %arg6[%c0_19] : memref<1xf32, #tpu.memory_space<smem>>
      %c0_20 = arith.constant 0 : index
      %27 = memref.load %arg5[%c0_20] : memref<98xf32, #tpu.memory_space<smem>>
      %c1_21 = arith.constant 1 : index
      %28 = memref.load %arg5[%c1_21] : memref<98xf32, #tpu.memory_space<smem>>
      %c2_22 = arith.constant 2 : index
      %29 = memref.load %arg5[%c2_22] : memref<98xf32, #tpu.memory_space<smem>>
      %c3_23 = arith.constant 3 : index
      %30 = memref.load %arg5[%c3_23] : memref<98xf32, #tpu.memory_space<smem>>
      %c4 = arith.constant 4 : index
      %31 = memref.load %arg5[%c4] : memref<98xf32, #tpu.memory_space<smem>>
      %c5 = arith.constant 5 : index
      %32 = memref.load %arg5[%c5] : memref<98xf32, #tpu.memory_space<smem>>
      %c6 = arith.constant 6 : index
      %33 = memref.load %arg5[%c6] : memref<98xf32, #tpu.memory_space<smem>>
      %c7 = arith.constant 7 : index
      %34 = memref.load %arg5[%c7] : memref<98xf32, #tpu.memory_space<smem>>
      %c8 = arith.constant 8 : index
      %35 = memref.load %arg5[%c8] : memref<98xf32, #tpu.memory_space<smem>>
      %c9 = arith.constant 9 : index
      %36 = memref.load %arg5[%c9] : memref<98xf32, #tpu.memory_space<smem>>
      %c10 = arith.constant 10 : index
      %37 = memref.load %arg5[%c10] : memref<98xf32, #tpu.memory_space<smem>>
      %c11 = arith.constant 11 : index
      %38 = memref.load %arg5[%c11] : memref<98xf32, #tpu.memory_space<smem>>
      %c12 = arith.constant 12 : index
      %39 = memref.load %arg5[%c12] : memref<98xf32, #tpu.memory_space<smem>>
      %c13 = arith.constant 13 : index
      %40 = memref.load %arg5[%c13] : memref<98xf32, #tpu.memory_space<smem>>
      %c14 = arith.constant 14 : index
      %41 = memref.load %arg5[%c14] : memref<98xf32, #tpu.memory_space<smem>>
      %c15 = arith.constant 15 : index
      %42 = memref.load %arg5[%c15] : memref<98xf32, #tpu.memory_space<smem>>
      %c16 = arith.constant 16 : index
      %43 = memref.load %arg5[%c16] : memref<98xf32, #tpu.memory_space<smem>>
      %c17 = arith.constant 17 : index
      %44 = memref.load %arg5[%c17] : memref<98xf32, #tpu.memory_space<smem>>
      %c18 = arith.constant 18 : index
      %45 = memref.load %arg5[%c18] : memref<98xf32, #tpu.memory_space<smem>>
      %c19 = arith.constant 19 : index
      %46 = memref.load %arg5[%c19] : memref<98xf32, #tpu.memory_space<smem>>
      %c20 = arith.constant 20 : index
      %47 = memref.load %arg5[%c20] : memref<98xf32, #tpu.memory_space<smem>>
      %c21 = arith.constant 21 : index
      %48 = memref.load %arg5[%c21] : memref<98xf32, #tpu.memory_space<smem>>
      %c22 = arith.constant 22 : index
      %49 = memref.load %arg5[%c22] : memref<98xf32, #tpu.memory_space<smem>>
      %c23 = arith.constant 23 : index
      %50 = memref.load %arg5[%c23] : memref<98xf32, #tpu.memory_space<smem>>
      %c24 = arith.constant 24 : index
      %51 = memref.load %arg5[%c24] : memref<98xf32, #tpu.memory_space<smem>>
      %c25 = arith.constant 25 : index
      %52 = memref.load %arg5[%c25] : memref<98xf32, #tpu.memory_space<smem>>
      %c26 = arith.constant 26 : index
      %53 = memref.load %arg5[%c26] : memref<98xf32, #tpu.memory_space<smem>>
      %c27 = arith.constant 27 : index
      %54 = memref.load %arg5[%c27] : memref<98xf32, #tpu.memory_space<smem>>
      %c28 = arith.constant 28 : index
      %55 = memref.load %arg5[%c28] : memref<98xf32, #tpu.memory_space<smem>>
      %c29 = arith.constant 29 : index
      %56 = memref.load %arg5[%c29] : memref<98xf32, #tpu.memory_space<smem>>
      %c30 = arith.constant 30 : index
      %57 = memref.load %arg5[%c30] : memref<98xf32, #tpu.memory_space<smem>>
      %c31 = arith.constant 31 : index
      %58 = memref.load %arg5[%c31] : memref<98xf32, #tpu.memory_space<smem>>
      %c32 = arith.constant 32 : index
      %59 = memref.load %arg5[%c32] : memref<98xf32, #tpu.memory_space<smem>>
      %c33 = arith.constant 33 : index
      %60 = memref.load %arg5[%c33] : memref<98xf32, #tpu.memory_space<smem>>
      %c34 = arith.constant 34 : index
      %61 = memref.load %arg5[%c34] : memref<98xf32, #tpu.memory_space<smem>>
      %c35 = arith.constant 35 : index
      %62 = memref.load %arg5[%c35] : memref<98xf32, #tpu.memory_space<smem>>
      %c36 = arith.constant 36 : index
      %63 = memref.load %arg5[%c36] : memref<98xf32, #tpu.memory_space<smem>>
      %c37 = arith.constant 37 : index
      %64 = memref.load %arg5[%c37] : memref<98xf32, #tpu.memory_space<smem>>
      %c38 = arith.constant 38 : index
      %65 = memref.load %arg5[%c38] : memref<98xf32, #tpu.memory_space<smem>>
      %c39 = arith.constant 39 : index
      %66 = memref.load %arg5[%c39] : memref<98xf32, #tpu.memory_space<smem>>
      %c40 = arith.constant 40 : index
      %67 = memref.load %arg5[%c40] : memref<98xf32, #tpu.memory_space<smem>>
      %c41 = arith.constant 41 : index
      %68 = memref.load %arg5[%c41] : memref<98xf32, #tpu.memory_space<smem>>
      %c42 = arith.constant 42 : index
      %69 = memref.load %arg5[%c42] : memref<98xf32, #tpu.memory_space<smem>>
      %c43 = arith.constant 43 : index
      %70 = memref.load %arg5[%c43] : memref<98xf32, #tpu.memory_space<smem>>
      %c44 = arith.constant 44 : index
      %71 = memref.load %arg5[%c44] : memref<98xf32, #tpu.memory_space<smem>>
      %c45 = arith.constant 45 : index
      %72 = memref.load %arg5[%c45] : memref<98xf32, #tpu.memory_space<smem>>
      %c46 = arith.constant 46 : index
      %73 = memref.load %arg5[%c46] : memref<98xf32, #tpu.memory_space<smem>>
      %c47 = arith.constant 47 : index
      %74 = memref.load %arg5[%c47] : memref<98xf32, #tpu.memory_space<smem>>
      %c48 = arith.constant 48 : index
      %75 = memref.load %arg5[%c48] : memref<98xf32, #tpu.memory_space<smem>>
      %c49 = arith.constant 49 : index
      %76 = memref.load %arg5[%c49] : memref<98xf32, #tpu.memory_space<smem>>
      %c50 = arith.constant 50 : index
      %77 = memref.load %arg5[%c50] : memref<98xf32, #tpu.memory_space<smem>>
      %c51 = arith.constant 51 : index
      %78 = memref.load %arg5[%c51] : memref<98xf32, #tpu.memory_space<smem>>
      %c52 = arith.constant 52 : index
      %79 = memref.load %arg5[%c52] : memref<98xf32, #tpu.memory_space<smem>>
      %c53 = arith.constant 53 : index
      %80 = memref.load %arg5[%c53] : memref<98xf32, #tpu.memory_space<smem>>
      %c54 = arith.constant 54 : index
      %81 = memref.load %arg5[%c54] : memref<98xf32, #tpu.memory_space<smem>>
      %c55 = arith.constant 55 : index
      %82 = memref.load %arg5[%c55] : memref<98xf32, #tpu.memory_space<smem>>
      %c56 = arith.constant 56 : index
      %83 = memref.load %arg5[%c56] : memref<98xf32, #tpu.memory_space<smem>>
      %c57 = arith.constant 57 : index
      %84 = memref.load %arg5[%c57] : memref<98xf32, #tpu.memory_space<smem>>
      %c58 = arith.constant 58 : index
      %85 = memref.load %arg5[%c58] : memref<98xf32, #tpu.memory_space<smem>>
      %c59 = arith.constant 59 : index
      %86 = memref.load %arg5[%c59] : memref<98xf32, #tpu.memory_space<smem>>
      %c60 = arith.constant 60 : index
      %87 = memref.load %arg5[%c60] : memref<98xf32, #tpu.memory_space<smem>>
      %c61 = arith.constant 61 : index
      %88 = memref.load %arg5[%c61] : memref<98xf32, #tpu.memory_space<smem>>
      %c62 = arith.constant 62 : index
      %89 = memref.load %arg5[%c62] : memref<98xf32, #tpu.memory_space<smem>>
      %c63 = arith.constant 63 : index
      %90 = memref.load %arg5[%c63] : memref<98xf32, #tpu.memory_space<smem>>
      %c64 = arith.constant 64 : index
      %91 = memref.load %arg5[%c64] : memref<98xf32, #tpu.memory_space<smem>>
      %c65 = arith.constant 65 : index
      %92 = memref.load %arg5[%c65] : memref<98xf32, #tpu.memory_space<smem>>
      %c66 = arith.constant 66 : index
      %93 = memref.load %arg5[%c66] : memref<98xf32, #tpu.memory_space<smem>>
      %c67 = arith.constant 67 : index
      %94 = memref.load %arg5[%c67] : memref<98xf32, #tpu.memory_space<smem>>
      %c68 = arith.constant 68 : index
      %95 = memref.load %arg5[%c68] : memref<98xf32, #tpu.memory_space<smem>>
      %c69 = arith.constant 69 : index
      %96 = memref.load %arg5[%c69] : memref<98xf32, #tpu.memory_space<smem>>
      %c70 = arith.constant 70 : index
      %97 = memref.load %arg5[%c70] : memref<98xf32, #tpu.memory_space<smem>>
      %c71 = arith.constant 71 : index
      %98 = memref.load %arg5[%c71] : memref<98xf32, #tpu.memory_space<smem>>
      %c72 = arith.constant 72 : index
      %99 = memref.load %arg5[%c72] : memref<98xf32, #tpu.memory_space<smem>>
      %c73 = arith.constant 73 : index
      %100 = memref.load %arg5[%c73] : memref<98xf32, #tpu.memory_space<smem>>
      %c74 = arith.constant 74 : index
      %101 = memref.load %arg5[%c74] : memref<98xf32, #tpu.memory_space<smem>>
      %c75 = arith.constant 75 : index
      %102 = memref.load %arg5[%c75] : memref<98xf32, #tpu.memory_space<smem>>
      %c76 = arith.constant 76 : index
      %103 = memref.load %arg5[%c76] : memref<98xf32, #tpu.memory_space<smem>>
      %c77 = arith.constant 77 : index
      %104 = memref.load %arg5[%c77] : memref<98xf32, #tpu.memory_space<smem>>
      %c78 = arith.constant 78 : index
      %105 = memref.load %arg5[%c78] : memref<98xf32, #tpu.memory_space<smem>>
      %c79 = arith.constant 79 : index
      %106 = memref.load %arg5[%c79] : memref<98xf32, #tpu.memory_space<smem>>
      %c80 = arith.constant 80 : index
      %107 = memref.load %arg5[%c80] : memref<98xf32, #tpu.memory_space<smem>>
      %c81 = arith.constant 81 : index
      %108 = memref.load %arg5[%c81] : memref<98xf32, #tpu.memory_space<smem>>
      %c82 = arith.constant 82 : index
      %109 = memref.load %arg5[%c82] : memref<98xf32, #tpu.memory_space<smem>>
      %c83 = arith.constant 83 : index
      %110 = memref.load %arg5[%c83] : memref<98xf32, #tpu.memory_space<smem>>
      %c84 = arith.constant 84 : index
      %111 = memref.load %arg5[%c84] : memref<98xf32, #tpu.memory_space<smem>>
      %c85 = arith.constant 85 : index
      %112 = memref.load %arg5[%c85] : memref<98xf32, #tpu.memory_space<smem>>
      %c86 = arith.constant 86 : index
      %113 = memref.load %arg5[%c86] : memref<98xf32, #tpu.memory_space<smem>>
      %c87 = arith.constant 87 : index
      %114 = memref.load %arg5[%c87] : memref<98xf32, #tpu.memory_space<smem>>
      %c88 = arith.constant 88 : index
      %115 = memref.load %arg5[%c88] : memref<98xf32, #tpu.memory_space<smem>>
      %c89 = arith.constant 89 : index
      %116 = memref.load %arg5[%c89] : memref<98xf32, #tpu.memory_space<smem>>
      %c90 = arith.constant 90 : index
      %117 = memref.load %arg5[%c90] : memref<98xf32, #tpu.memory_space<smem>>
      %c91 = arith.constant 91 : index
      %118 = memref.load %arg5[%c91] : memref<98xf32, #tpu.memory_space<smem>>
      %c92 = arith.constant 92 : index
      %119 = memref.load %arg5[%c92] : memref<98xf32, #tpu.memory_space<smem>>
      %c93 = arith.constant 93 : index
      %120 = memref.load %arg5[%c93] : memref<98xf32, #tpu.memory_space<smem>>
      %c94 = arith.constant 94 : index
      %121 = memref.load %arg5[%c94] : memref<98xf32, #tpu.memory_space<smem>>
      %c95 = arith.constant 95 : index
      %122 = memref.load %arg5[%c95] : memref<98xf32, #tpu.memory_space<smem>>
      %c96 = arith.constant 96 : index
      %123 = memref.load %arg5[%c96] : memref<98xf32, #tpu.memory_space<smem>>
      %c97 = arith.constant 97 : index
      %124 = memref.load %arg5[%c97] : memref<98xf32, #tpu.memory_space<smem>>
      %c0_24 = arith.constant 0 : index
      %c0_25 = arith.constant 0 : index
      %125 = vector.load %arg3[%c0_24, %c0_25] : memref<1x256xi32, #tpu.memory_space<vmem>>, vector<1x256xi32>
      %c0_26 = arith.constant 0 : index
      %c0_27 = arith.constant 0 : index
      %126 = vector.load %arg4[%c0_26, %c0_27] : memref<1x256xi32, #tpu.memory_space<vmem>>, vector<1x256xi32>
      %c0_28 = arith.constant 0 : index
      %c0_29 = arith.constant 0 : index
      %127 = vector.load %arg8[%c0_28, %c0_29] : memref<1x256xf32, #tpu.memory_space<vmem>>, vector<1x256xf32>
      %cst = arith.constant 2.500000e-01 : f32
      %128 = vector.broadcast %cst : f32 to vector<1x256xf32>
      %129 = arith.mulf %127, %128 : vector<1x256xf32>
      %c0_30 = arith.constant 0 : index
      %c0_31 = arith.constant 0 : index
      %130 = vector.load %arg9[%c0_30, %c0_31] : memref<1x256xf32, #tpu.memory_space<vmem>>, vector<1x256xf32>
      %c3_i32 = arith.constant 3 : i32
      %131 = tpu.dynamic_rotate %129 by %c3_i32 dim 1 : vector<1x256xf32>, i32 -> vector<1x256xf32>
      %c3_i32_32 = arith.constant 3 : i32
      %132 = vector.broadcast %c3_i32_32 : i32 to vector<1x256xi32>
      %133 = arith.cmpi sge, %125, %132 : vector<1x256xi32>
      %cst_33 = arith.constant 0.000000e+00 : f32
      %134 = vector.broadcast %cst_33 : f32 to vector<1x256xf32>
      %135 = arith.select %133, %131, %134 : vector<1x256xi1>, vector<1x256xf32>
      %c2_i32 = arith.constant 2 : i32
      %136 = tpu.dynamic_rotate %129 by %c2_i32 dim 1 : vector<1x256xf32>, i32 -> vector<1x256xf32>
      %c2_i32_34 = arith.constant 2 : i32
      %137 = vector.broadcast %c2_i32_34 : i32 to vector<1x256xi32>
      %138 = arith.cmpi sge, %125, %137 : vector<1x256xi32>
      %cst_35 = arith.constant 0.000000e+00 : f32
      %139 = vector.broadcast %cst_35 : f32 to vector<1x256xf32>
      %140 = arith.select %138, %136, %139 : vector<1x256xi1>, vector<1x256xf32>
      %c1_i32 = arith.constant 1 : i32
      %141 = tpu.dynamic_rotate %129 by %c1_i32 dim 1 : vector<1x256xf32>, i32 -> vector<1x256xf32>
      %c1_i32_36 = arith.constant 1 : i32
      %142 = vector.broadcast %c1_i32_36 : i32 to vector<1x256xi32>
      %143 = arith.cmpi sge, %125, %142 : vector<1x256xi32>
      %cst_37 = arith.constant 0.000000e+00 : f32
      %144 = vector.broadcast %cst_37 : f32 to vector<1x256xf32>
      %145 = arith.select %143, %141, %144 : vector<1x256xi1>, vector<1x256xf32>
      %c255_i32 = arith.constant 255 : i32
      %146 = tpu.dynamic_rotate %129 by %c255_i32 dim 1 : vector<1x256xf32>, i32 -> vector<1x256xf32>
      %c15_i32 = arith.constant 15 : i32
      %147 = vector.broadcast %c15_i32 : i32 to vector<1x256xi32>
      %148 = arith.cmpi slt, %125, %147 : vector<1x256xi32>
      %cst_38 = arith.constant 0.000000e+00 : f32
      %149 = vector.broadcast %cst_38 : f32 to vector<1x256xf32>
      %150 = arith.select %148, %146, %149 : vector<1x256xi1>, vector<1x256xf32>
      %c254_i32 = arith.constant 254 : i32
      %151 = tpu.dynamic_rotate %129 by %c254_i32 dim 1 : vector<1x256xf32>, i32 -> vector<1x256xf32>
      %c14_i32 = arith.constant 14 : i32
      %152 = vector.broadcast %c14_i32 : i32 to vector<1x256xi32>
      %153 = arith.cmpi slt, %125, %152 : vector<1x256xi32>
      %cst_39 = arith.constant 0.000000e+00 : f32
      %154 = vector.broadcast %cst_39 : f32 to vector<1x256xf32>
      %155 = arith.select %153, %151, %154 : vector<1x256xi1>, vector<1x256xf32>
      %c253_i32 = arith.constant 253 : i32
      %156 = tpu.dynamic_rotate %129 by %c253_i32 dim 1 : vector<1x256xf32>, i32 -> vector<1x256xf32>
      %c13_i32 = arith.constant 13 : i32
      %157 = vector.broadcast %c13_i32 : i32 to vector<1x256xi32>
      %158 = arith.cmpi slt, %125, %157 : vector<1x256xi32>
      %cst_40 = arith.constant 0.000000e+00 : f32
      %159 = vector.broadcast %cst_40 : f32 to vector<1x256xf32>
      %160 = arith.select %158, %156, %159 : vector<1x256xi1>, vector<1x256xf32>
      %c3_i32_41 = arith.constant 3 : i32
      %161 = tpu.dynamic_rotate %130 by %c3_i32_41 dim 1 : vector<1x256xf32>, i32 -> vector<1x256xf32>
      %c3_i32_42 = arith.constant 3 : i32
      %162 = vector.broadcast %c3_i32_42 : i32 to vector<1x256xi32>
      %163 = arith.cmpi sge, %125, %162 : vector<1x256xi32>
      %cst_43 = arith.constant 0.000000e+00 : f32
      %164 = vector.broadcast %cst_43 : f32 to vector<1x256xf32>
      %165 = arith.select %163, %161, %164 : vector<1x256xi1>, vector<1x256xf32>
      %c2_i32_44 = arith.constant 2 : i32
      %166 = tpu.dynamic_rotate %130 by %c2_i32_44 dim 1 : vector<1x256xf32>, i32 -> vector<1x256xf32>
      %c2_i32_45 = arith.constant 2 : i32
      %167 = vector.broadcast %c2_i32_45 : i32 to vector<1x256xi32>
      %168 = arith.cmpi sge, %125, %167 : vector<1x256xi32>
      %cst_46 = arith.constant 0.000000e+00 : f32
      %169 = vector.broadcast %cst_46 : f32 to vector<1x256xf32>
      %170 = arith.select %168, %166, %169 : vector<1x256xi1>, vector<1x256xf32>
      %c1_i32_47 = arith.constant 1 : i32
      %171 = tpu.dynamic_rotate %130 by %c1_i32_47 dim 1 : vector<1x256xf32>, i32 -> vector<1x256xf32>
      %c1_i32_48 = arith.constant 1 : i32
      %172 = vector.broadcast %c1_i32_48 : i32 to vector<1x256xi32>
      %173 = arith.cmpi sge, %125, %172 : vector<1x256xi32>
      %cst_49 = arith.constant 0.000000e+00 : f32
      %174 = vector.broadcast %cst_49 : f32 to vector<1x256xf32>
      %175 = arith.select %173, %171, %174 : vector<1x256xi1>, vector<1x256xf32>
      %c255_i32_50 = arith.constant 255 : i32
      %176 = tpu.dynamic_rotate %130 by %c255_i32_50 dim 1 : vector<1x256xf32>, i32 -> vector<1x256xf32>
      %c15_i32_51 = arith.constant 15 : i32
      %177 = vector.broadcast %c15_i32_51 : i32 to vector<1x256xi32>
      %178 = arith.cmpi slt, %125, %177 : vector<1x256xi32>
      %cst_52 = arith.constant 0.000000e+00 : f32
      %179 = vector.broadcast %cst_52 : f32 to vector<1x256xf32>
      %180 = arith.select %178, %176, %179 : vector<1x256xi1>, vector<1x256xf32>
      %c254_i32_53 = arith.constant 254 : i32
      %181 = tpu.dynamic_rotate %130 by %c254_i32_53 dim 1 : vector<1x256xf32>, i32 -> vector<1x256xf32>
      %c14_i32_54 = arith.constant 14 : i32
      %182 = vector.broadcast %c14_i32_54 : i32 to vector<1x256xi32>
      %183 = arith.cmpi slt, %125, %182 : vector<1x256xi32>
      %cst_55 = arith.constant 0.000000e+00 : f32
      %184 = vector.broadcast %cst_55 : f32 to vector<1x256xf32>
      %185 = arith.select %183, %181, %184 : vector<1x256xi1>, vector<1x256xf32>
      %c253_i32_56 = arith.constant 253 : i32
      %186 = tpu.dynamic_rotate %130 by %c253_i32_56 dim 1 : vector<1x256xf32>, i32 -> vector<1x256xf32>
      %c13_i32_57 = arith.constant 13 : i32
      %187 = vector.broadcast %c13_i32_57 : i32 to vector<1x256xi32>
      %188 = arith.cmpi slt, %125, %187 : vector<1x256xi32>
      %cst_58 = arith.constant 0.000000e+00 : f32
      %189 = vector.broadcast %cst_58 : f32 to vector<1x256xf32>
      %190 = arith.select %188, %186, %189 : vector<1x256xi1>, vector<1x256xf32>
      %191 = vector.broadcast %27 : f32 to vector<1x256xf32>
      %192 = arith.mulf %191, %135 : vector<1x256xf32>
      %193 = vector.broadcast %28 : f32 to vector<1x256xf32>
      %194 = arith.mulf %193, %140 : vector<1x256xf32>
      %195 = vector.broadcast %29 : f32 to vector<1x256xf32>
      %196 = arith.mulf %195, %145 : vector<1x256xf32>
      %197 = arith.addf %192, %196 : vector<1x256xf32>
      %198 = vector.broadcast %30 : f32 to vector<1x256xf32>
      %199 = arith.mulf %198, %129 : vector<1x256xf32>
      %200 = arith.addf %194, %199 : vector<1x256xf32>
      %201 = vector.broadcast %31 : f32 to vector<1x256xf32>
      %202 = arith.mulf %201, %150 : vector<1x256xf32>
      %203 = arith.addf %197, %202 : vector<1x256xf32>
      %204 = vector.broadcast %32 : f32 to vector<1x256xf32>
      %205 = arith.mulf %204, %155 : vector<1x256xf32>
      %206 = arith.addf %200, %205 : vector<1x256xf32>
      %207 = vector.broadcast %33 : f32 to vector<1x256xf32>
      %208 = arith.mulf %207, %160 : vector<1x256xf32>
      %209 = arith.addf %203, %208 : vector<1x256xf32>
      %210 = vector.broadcast %76 : f32 to vector<1x256xf32>
      %211 = arith.mulf %210, %165 : vector<1x256xf32>
      %212 = arith.addf %206, %211 : vector<1x256xf32>
      %213 = vector.broadcast %77 : f32 to vector<1x256xf32>
      %214 = arith.mulf %213, %170 : vector<1x256xf32>
      %215 = arith.addf %209, %214 : vector<1x256xf32>
      %216 = vector.broadcast %78 : f32 to vector<1x256xf32>
      %217 = arith.mulf %216, %175 : vector<1x256xf32>
      %218 = arith.addf %212, %217 : vector<1x256xf32>
      %219 = vector.broadcast %79 : f32 to vector<1x256xf32>
      %220 = arith.mulf %219, %130 : vector<1x256xf32>
      %221 = arith.addf %215, %220 : vector<1x256xf32>
      %222 = vector.broadcast %80 : f32 to vector<1x256xf32>
      %223 = arith.mulf %222, %180 : vector<1x256xf32>
      %224 = arith.addf %218, %223 : vector<1x256xf32>
      %225 = vector.broadcast %81 : f32 to vector<1x256xf32>
      %226 = arith.mulf %225, %185 : vector<1x256xf32>
      %227 = arith.addf %221, %226 : vector<1x256xf32>
      %228 = vector.broadcast %82 : f32 to vector<1x256xf32>
      %229 = arith.mulf %228, %190 : vector<1x256xf32>
      %230 = arith.addf %224, %229 : vector<1x256xf32>
      %231 = arith.addf %227, %230 : vector<1x256xf32>
      %c48_i32 = arith.constant 48 : i32
      %232 = tpu.dynamic_rotate %231 by %c48_i32 dim 1 : vector<1x256xf32>, i32 -> vector<1x256xf32>
      %c3_i32_59 = arith.constant 3 : i32
      %233 = vector.broadcast %c3_i32_59 : i32 to vector<1x256xi32>
      %234 = arith.cmpi sge, %126, %233 : vector<1x256xi32>
      %cst_60 = arith.constant 0.000000e+00 : f32
      %235 = vector.broadcast %cst_60 : f32 to vector<1x256xf32>
      %236 = arith.select %234, %232, %235 : vector<1x256xi1>, vector<1x256xf32>
      %237 = vector.broadcast %34 : f32 to vector<1x256xf32>
      %238 = arith.mulf %237, %135 : vector<1x256xf32>
      %239 = vector.broadcast %35 : f32 to vector<1x256xf32>
      %240 = arith.mulf %239, %140 : vector<1x256xf32>
      %241 = vector.broadcast %36 : f32 to vector<1x256xf32>
      %242 = arith.mulf %241, %145 : vector<1x256xf32>
      %243 = arith.addf %238, %242 : vector<1x256xf32>
      %244 = vector.broadcast %37 : f32 to vector<1x256xf32>
      %245 = arith.mulf %244, %129 : vector<1x256xf32>
      %246 = arith.addf %240, %245 : vector<1x256xf32>
      %247 = vector.broadcast %38 : f32 to vector<1x256xf32>
      %248 = arith.mulf %247, %150 : vector<1x256xf32>
      %249 = arith.addf %243, %248 : vector<1x256xf32>
      %250 = vector.broadcast %39 : f32 to vector<1x256xf32>
      %251 = arith.mulf %250, %155 : vector<1x256xf32>
      %252 = arith.addf %246, %251 : vector<1x256xf32>
      %253 = vector.broadcast %40 : f32 to vector<1x256xf32>
      %254 = arith.mulf %253, %160 : vector<1x256xf32>
      %255 = arith.addf %249, %254 : vector<1x256xf32>
      %256 = vector.broadcast %83 : f32 to vector<1x256xf32>
      %257 = arith.mulf %256, %165 : vector<1x256xf32>
      %258 = arith.addf %252, %257 : vector<1x256xf32>
      %259 = vector.broadcast %84 : f32 to vector<1x256xf32>
      %260 = arith.mulf %259, %170 : vector<1x256xf32>
      %261 = arith.addf %255, %260 : vector<1x256xf32>
      %262 = vector.broadcast %85 : f32 to vector<1x256xf32>
      %263 = arith.mulf %262, %175 : vector<1x256xf32>
      %264 = arith.addf %258, %263 : vector<1x256xf32>
      %265 = vector.broadcast %86 : f32 to vector<1x256xf32>
      %266 = arith.mulf %265, %130 : vector<1x256xf32>
      %267 = arith.addf %261, %266 : vector<1x256xf32>
      %268 = vector.broadcast %87 : f32 to vector<1x256xf32>
      %269 = arith.mulf %268, %180 : vector<1x256xf32>
      %270 = arith.addf %264, %269 : vector<1x256xf32>
      %271 = vector.broadcast %88 : f32 to vector<1x256xf32>
      %272 = arith.mulf %271, %185 : vector<1x256xf32>
      %273 = arith.addf %267, %272 : vector<1x256xf32>
      %274 = vector.broadcast %89 : f32 to vector<1x256xf32>
      %275 = arith.mulf %274, %190 : vector<1x256xf32>
      %276 = arith.addf %270, %275 : vector<1x256xf32>
      %277 = arith.addf %273, %276 : vector<1x256xf32>
      %c32_i32 = arith.constant 32 : i32
      %278 = tpu.dynamic_rotate %277 by %c32_i32 dim 1 : vector<1x256xf32>, i32 -> vector<1x256xf32>
      %c2_i32_61 = arith.constant 2 : i32
      %279 = vector.broadcast %c2_i32_61 : i32 to vector<1x256xi32>
      %280 = arith.cmpi sge, %126, %279 : vector<1x256xi32>
      %cst_62 = arith.constant 0.000000e+00 : f32
      %281 = vector.broadcast %cst_62 : f32 to vector<1x256xf32>
      %282 = arith.select %280, %278, %281 : vector<1x256xi1>, vector<1x256xf32>
      %283 = arith.addf %236, %282 : vector<1x256xf32>
      %284 = vector.broadcast %41 : f32 to vector<1x256xf32>
      %285 = arith.mulf %284, %135 : vector<1x256xf32>
      %286 = vector.broadcast %42 : f32 to vector<1x256xf32>
      %287 = arith.mulf %286, %140 : vector<1x256xf32>
      %288 = vector.broadcast %43 : f32 to vector<1x256xf32>
      %289 = arith.mulf %288, %145 : vector<1x256xf32>
      %290 = arith.addf %285, %289 : vector<1x256xf32>
      %291 = vector.broadcast %44 : f32 to vector<1x256xf32>
      %292 = arith.mulf %291, %129 : vector<1x256xf32>
      %293 = arith.addf %287, %292 : vector<1x256xf32>
      %294 = vector.broadcast %45 : f32 to vector<1x256xf32>
      %295 = arith.mulf %294, %150 : vector<1x256xf32>
      %296 = arith.addf %290, %295 : vector<1x256xf32>
      %297 = vector.broadcast %46 : f32 to vector<1x256xf32>
      %298 = arith.mulf %297, %155 : vector<1x256xf32>
      %299 = arith.addf %293, %298 : vector<1x256xf32>
      %300 = vector.broadcast %47 : f32 to vector<1x256xf32>
      %301 = arith.mulf %300, %160 : vector<1x256xf32>
      %302 = arith.addf %296, %301 : vector<1x256xf32>
      %303 = vector.broadcast %90 : f32 to vector<1x256xf32>
      %304 = arith.mulf %303, %165 : vector<1x256xf32>
      %305 = arith.addf %299, %304 : vector<1x256xf32>
      %306 = vector.broadcast %91 : f32 to vector<1x256xf32>
      %307 = arith.mulf %306, %170 : vector<1x256xf32>
      %308 = arith.addf %302, %307 : vector<1x256xf32>
      %309 = vector.broadcast %92 : f32 to vector<1x256xf32>
      %310 = arith.mulf %309, %175 : vector<1x256xf32>
      %311 = arith.addf %305, %310 : vector<1x256xf32>
      %312 = vector.broadcast %93 : f32 to vector<1x256xf32>
      %313 = arith.mulf %312, %130 : vector<1x256xf32>
      %314 = arith.addf %308, %313 : vector<1x256xf32>
      %315 = vector.broadcast %94 : f32 to vector<1x256xf32>
      %316 = arith.mulf %315, %180 : vector<1x256xf32>
      %317 = arith.addf %311, %316 : vector<1x256xf32>
      %318 = vector.broadcast %95 : f32 to vector<1x256xf32>
      %319 = arith.mulf %318, %185 : vector<1x256xf32>
      %320 = arith.addf %314, %319 : vector<1x256xf32>
      %321 = vector.broadcast %96 : f32 to vector<1x256xf32>
      %322 = arith.mulf %321, %190 : vector<1x256xf32>
      %323 = arith.addf %317, %322 : vector<1x256xf32>
      %324 = arith.addf %320, %323 : vector<1x256xf32>
      %c16_i32 = arith.constant 16 : i32
      %325 = tpu.dynamic_rotate %324 by %c16_i32 dim 1 : vector<1x256xf32>, i32 -> vector<1x256xf32>
      %c1_i32_63 = arith.constant 1 : i32
      %326 = vector.broadcast %c1_i32_63 : i32 to vector<1x256xi32>
      %327 = arith.cmpi sge, %126, %326 : vector<1x256xi32>
      %cst_64 = arith.constant 0.000000e+00 : f32
      %328 = vector.broadcast %cst_64 : f32 to vector<1x256xf32>
      %329 = arith.select %327, %325, %328 : vector<1x256xi1>, vector<1x256xf32>
      %330 = arith.addf %283, %329 : vector<1x256xf32>
      %331 = vector.broadcast %48 : f32 to vector<1x256xf32>
      %332 = arith.mulf %331, %135 : vector<1x256xf32>
      %333 = vector.broadcast %49 : f32 to vector<1x256xf32>
      %334 = arith.mulf %333, %140 : vector<1x256xf32>
      %335 = vector.broadcast %50 : f32 to vector<1x256xf32>
      %336 = arith.mulf %335, %145 : vector<1x256xf32>
      %337 = arith.addf %332, %336 : vector<1x256xf32>
      %338 = vector.broadcast %51 : f32 to vector<1x256xf32>
      %339 = arith.mulf %338, %129 : vector<1x256xf32>
      %340 = arith.addf %334, %339 : vector<1x256xf32>
      %341 = vector.broadcast %52 : f32 to vector<1x256xf32>
      %342 = arith.mulf %341, %150 : vector<1x256xf32>
      %343 = arith.addf %337, %342 : vector<1x256xf32>
      %344 = vector.broadcast %53 : f32 to vector<1x256xf32>
      %345 = arith.mulf %344, %155 : vector<1x256xf32>
      %346 = arith.addf %340, %345 : vector<1x256xf32>
      %347 = vector.broadcast %54 : f32 to vector<1x256xf32>
      %348 = arith.mulf %347, %160 : vector<1x256xf32>
      %349 = arith.addf %343, %348 : vector<1x256xf32>
      %350 = vector.broadcast %97 : f32 to vector<1x256xf32>
      %351 = arith.mulf %350, %165 : vector<1x256xf32>
      %352 = arith.addf %346, %351 : vector<1x256xf32>
      %353 = vector.broadcast %98 : f32 to vector<1x256xf32>
      %354 = arith.mulf %353, %170 : vector<1x256xf32>
      %355 = arith.addf %349, %354 : vector<1x256xf32>
      %356 = vector.broadcast %99 : f32 to vector<1x256xf32>
      %357 = arith.mulf %356, %175 : vector<1x256xf32>
      %358 = arith.addf %352, %357 : vector<1x256xf32>
      %359 = vector.broadcast %100 : f32 to vector<1x256xf32>
      %360 = arith.mulf %359, %130 : vector<1x256xf32>
      %361 = arith.addf %355, %360 : vector<1x256xf32>
      %362 = vector.broadcast %101 : f32 to vector<1x256xf32>
      %363 = arith.mulf %362, %180 : vector<1x256xf32>
      %364 = arith.addf %358, %363 : vector<1x256xf32>
      %365 = vector.broadcast %102 : f32 to vector<1x256xf32>
      %366 = arith.mulf %365, %185 : vector<1x256xf32>
      %367 = arith.addf %361, %366 : vector<1x256xf32>
      %368 = vector.broadcast %103 : f32 to vector<1x256xf32>
      %369 = arith.mulf %368, %190 : vector<1x256xf32>
      %370 = arith.addf %364, %369 : vector<1x256xf32>
      %371 = arith.addf %367, %370 : vector<1x256xf32>
      %372 = arith.addf %330, %371 : vector<1x256xf32>
      %373 = vector.broadcast %55 : f32 to vector<1x256xf32>
      %374 = arith.mulf %373, %135 : vector<1x256xf32>
      %375 = vector.broadcast %56 : f32 to vector<1x256xf32>
      %376 = arith.mulf %375, %140 : vector<1x256xf32>
      %377 = vector.broadcast %57 : f32 to vector<1x256xf32>
      %378 = arith.mulf %377, %145 : vector<1x256xf32>
      %379 = arith.addf %374, %378 : vector<1x256xf32>
      %380 = vector.broadcast %58 : f32 to vector<1x256xf32>
      %381 = arith.mulf %380, %129 : vector<1x256xf32>
      %382 = arith.addf %376, %381 : vector<1x256xf32>
      %383 = vector.broadcast %59 : f32 to vector<1x256xf32>
      %384 = arith.mulf %383, %150 : vector<1x256xf32>
      %385 = arith.addf %379, %384 : vector<1x256xf32>
      %386 = vector.broadcast %60 : f32 to vector<1x256xf32>
      %387 = arith.mulf %386, %155 : vector<1x256xf32>
      %388 = arith.addf %382, %387 : vector<1x256xf32>
      %389 = vector.broadcast %61 : f32 to vector<1x256xf32>
      %390 = arith.mulf %389, %160 : vector<1x256xf32>
      %391 = arith.addf %385, %390 : vector<1x256xf32>
      %392 = vector.broadcast %104 : f32 to vector<1x256xf32>
      %393 = arith.mulf %392, %165 : vector<1x256xf32>
      %394 = arith.addf %388, %393 : vector<1x256xf32>
      %395 = vector.broadcast %105 : f32 to vector<1x256xf32>
      %396 = arith.mulf %395, %170 : vector<1x256xf32>
      %397 = arith.addf %391, %396 : vector<1x256xf32>
      %398 = vector.broadcast %106 : f32 to vector<1x256xf32>
      %399 = arith.mulf %398, %175 : vector<1x256xf32>
      %400 = arith.addf %394, %399 : vector<1x256xf32>
      %401 = vector.broadcast %107 : f32 to vector<1x256xf32>
      %402 = arith.mulf %401, %130 : vector<1x256xf32>
      %403 = arith.addf %397, %402 : vector<1x256xf32>
      %404 = vector.broadcast %108 : f32 to vector<1x256xf32>
      %405 = arith.mulf %404, %180 : vector<1x256xf32>
      %406 = arith.addf %400, %405 : vector<1x256xf32>
      %407 = vector.broadcast %109 : f32 to vector<1x256xf32>
      %408 = arith.mulf %407, %185 : vector<1x256xf32>
      %409 = arith.addf %403, %408 : vector<1x256xf32>
      %410 = vector.broadcast %110 : f32 to vector<1x256xf32>
      %411 = arith.mulf %410, %190 : vector<1x256xf32>
      %412 = arith.addf %406, %411 : vector<1x256xf32>
      %413 = arith.addf %409, %412 : vector<1x256xf32>
      %c240_i32 = arith.constant 240 : i32
      %414 = tpu.dynamic_rotate %413 by %c240_i32 dim 1 : vector<1x256xf32>, i32 -> vector<1x256xf32>
      %c15_i32_65 = arith.constant 15 : i32
      %415 = vector.broadcast %c15_i32_65 : i32 to vector<1x256xi32>
      %416 = arith.cmpi slt, %126, %415 : vector<1x256xi32>
      %cst_66 = arith.constant 0.000000e+00 : f32
      %417 = vector.broadcast %cst_66 : f32 to vector<1x256xf32>
      %418 = arith.select %416, %414, %417 : vector<1x256xi1>, vector<1x256xf32>
      %419 = arith.addf %372, %418 : vector<1x256xf32>
      %420 = vector.broadcast %62 : f32 to vector<1x256xf32>
      %421 = arith.mulf %420, %135 : vector<1x256xf32>
      %422 = vector.broadcast %63 : f32 to vector<1x256xf32>
      %423 = arith.mulf %422, %140 : vector<1x256xf32>
      %424 = vector.broadcast %64 : f32 to vector<1x256xf32>
      %425 = arith.mulf %424, %145 : vector<1x256xf32>
      %426 = arith.addf %421, %425 : vector<1x256xf32>
      %427 = vector.broadcast %65 : f32 to vector<1x256xf32>
      %428 = arith.mulf %427, %129 : vector<1x256xf32>
      %429 = arith.addf %423, %428 : vector<1x256xf32>
      %430 = vector.broadcast %66 : f32 to vector<1x256xf32>
      %431 = arith.mulf %430, %150 : vector<1x256xf32>
      %432 = arith.addf %426, %431 : vector<1x256xf32>
      %433 = vector.broadcast %67 : f32 to vector<1x256xf32>
      %434 = arith.mulf %433, %155 : vector<1x256xf32>
      %435 = arith.addf %429, %434 : vector<1x256xf32>
      %436 = vector.broadcast %68 : f32 to vector<1x256xf32>
      %437 = arith.mulf %436, %160 : vector<1x256xf32>
      %438 = arith.addf %432, %437 : vector<1x256xf32>
      %439 = vector.broadcast %111 : f32 to vector<1x256xf32>
      %440 = arith.mulf %439, %165 : vector<1x256xf32>
      %441 = arith.addf %435, %440 : vector<1x256xf32>
      %442 = vector.broadcast %112 : f32 to vector<1x256xf32>
      %443 = arith.mulf %442, %170 : vector<1x256xf32>
      %444 = arith.addf %438, %443 : vector<1x256xf32>
      %445 = vector.broadcast %113 : f32 to vector<1x256xf32>
      %446 = arith.mulf %445, %175 : vector<1x256xf32>
      %447 = arith.addf %441, %446 : vector<1x256xf32>
      %448 = vector.broadcast %114 : f32 to vector<1x256xf32>
      %449 = arith.mulf %448, %130 : vector<1x256xf32>
      %450 = arith.addf %444, %449 : vector<1x256xf32>
      %451 = vector.broadcast %115 : f32 to vector<1x256xf32>
      %452 = arith.mulf %451, %180 : vector<1x256xf32>
      %453 = arith.addf %447, %452 : vector<1x256xf32>
      %454 = vector.broadcast %116 : f32 to vector<1x256xf32>
      %455 = arith.mulf %454, %185 : vector<1x256xf32>
      %456 = arith.addf %450, %455 : vector<1x256xf32>
      %457 = vector.broadcast %117 : f32 to vector<1x256xf32>
      %458 = arith.mulf %457, %190 : vector<1x256xf32>
      %459 = arith.addf %453, %458 : vector<1x256xf32>
      %460 = arith.addf %456, %459 : vector<1x256xf32>
      %c224_i32 = arith.constant 224 : i32
      %461 = tpu.dynamic_rotate %460 by %c224_i32 dim 1 : vector<1x256xf32>, i32 -> vector<1x256xf32>
      %c14_i32_67 = arith.constant 14 : i32
      %462 = vector.broadcast %c14_i32_67 : i32 to vector<1x256xi32>
      %463 = arith.cmpi slt, %126, %462 : vector<1x256xi32>
      %cst_68 = arith.constant 0.000000e+00 : f32
      %464 = vector.broadcast %cst_68 : f32 to vector<1x256xf32>
      %465 = arith.select %463, %461, %464 : vector<1x256xi1>, vector<1x256xf32>
      %466 = arith.addf %419, %465 : vector<1x256xf32>
      %467 = vector.broadcast %69 : f32 to vector<1x256xf32>
      %468 = arith.mulf %467, %135 : vector<1x256xf32>
      %469 = vector.broadcast %70 : f32 to vector<1x256xf32>
      %470 = arith.mulf %469, %140 : vector<1x256xf32>
      %471 = vector.broadcast %71 : f32 to vector<1x256xf32>
      %472 = arith.mulf %471, %145 : vector<1x256xf32>
      %473 = arith.addf %468, %472 : vector<1x256xf32>
      %474 = vector.broadcast %72 : f32 to vector<1x256xf32>
      %475 = arith.mulf %474, %129 : vector<1x256xf32>
      %476 = arith.addf %470, %475 : vector<1x256xf32>
      %477 = vector.broadcast %73 : f32 to vector<1x256xf32>
      %478 = arith.mulf %477, %150 : vector<1x256xf32>
      %479 = arith.addf %473, %478 : vector<1x256xf32>
      %480 = vector.broadcast %74 : f32 to vector<1x256xf32>
      %481 = arith.mulf %480, %155 : vector<1x256xf32>
      %482 = arith.addf %476, %481 : vector<1x256xf32>
      %483 = vector.broadcast %75 : f32 to vector<1x256xf32>
      %484 = arith.mulf %483, %160 : vector<1x256xf32>
      %485 = arith.addf %479, %484 : vector<1x256xf32>
      %486 = vector.broadcast %118 : f32 to vector<1x256xf32>
      %487 = arith.mulf %486, %165 : vector<1x256xf32>
      %488 = arith.addf %482, %487 : vector<1x256xf32>
      %489 = vector.broadcast %119 : f32 to vector<1x256xf32>
      %490 = arith.mulf %489, %170 : vector<1x256xf32>
      %491 = arith.addf %485, %490 : vector<1x256xf32>
      %492 = vector.broadcast %120 : f32 to vector<1x256xf32>
      %493 = arith.mulf %492, %175 : vector<1x256xf32>
      %494 = arith.addf %488, %493 : vector<1x256xf32>
      %495 = vector.broadcast %121 : f32 to vector<1x256xf32>
      %496 = arith.mulf %495, %130 : vector<1x256xf32>
      %497 = arith.addf %491, %496 : vector<1x256xf32>
      %498 = vector.broadcast %122 : f32 to vector<1x256xf32>
      %499 = arith.mulf %498, %180 : vector<1x256xf32>
      %500 = arith.addf %494, %499 : vector<1x256xf32>
      %501 = vector.broadcast %123 : f32 to vector<1x256xf32>
      %502 = arith.mulf %501, %185 : vector<1x256xf32>
      %503 = arith.addf %497, %502 : vector<1x256xf32>
      %504 = vector.broadcast %124 : f32 to vector<1x256xf32>
      %505 = arith.mulf %504, %190 : vector<1x256xf32>
      %506 = arith.addf %500, %505 : vector<1x256xf32>
      %507 = arith.addf %503, %506 : vector<1x256xf32>
      %c208_i32 = arith.constant 208 : i32
      %508 = tpu.dynamic_rotate %507 by %c208_i32 dim 1 : vector<1x256xf32>, i32 -> vector<1x256xf32>
      %c13_i32_69 = arith.constant 13 : i32
      %509 = vector.broadcast %c13_i32_69 : i32 to vector<1x256xi32>
      %510 = arith.cmpi slt, %126, %509 : vector<1x256xi32>
      %cst_70 = arith.constant 0.000000e+00 : f32
      %511 = vector.broadcast %cst_70 : f32 to vector<1x256xf32>
      %512 = arith.select %510, %508, %511 : vector<1x256xi1>, vector<1x256xf32>
      %513 = arith.addf %466, %512 : vector<1x256xf32>
      %514 = vector.broadcast %26 : f32 to vector<1x256xf32>
      %515 = arith.addf %513, %514 : vector<1x256xf32>
      %516 = arith.negf %515 : vector<1x256xf32>
      %517 = math.exp %516 : vector<1x256xf32>
      %cst_71 = arith.constant 1.000000e+00 : f32
      %518 = vector.broadcast %cst_71 : f32 to vector<1x256xf32>
      %519 = arith.addf %518, %517 : vector<1x256xf32>
      %520 = arith.divf %518, %519 : vector<1x256xf32>
      %c0_72 = arith.constant 0 : index
      %c0_73 = arith.constant 0 : index
      %c0_74 = arith.constant 0 : index
      %521 = vector.load %arg7[%c0_72, %c0_73, %c0_74] : memref<1x1x256xf32, #tpu.memory_space<vmem>>, vector<1x1x256xf32>
      %522 = vector.shape_cast %521 : vector<1x1x256xf32> to vector<1x256xf32>
      %523 = vector.shape_cast %520 : vector<1x256xf32> to vector<1x1x256xf32>
      tpu.vector_store %arg7[%c0_72, %c0_73, %c0_74], %523 {strides = array<i32>} : memref<1x1x256xf32, #tpu.memory_space<vmem>>, vector<1x1x256xf32>,
    } else {
    }
    return
  }
  func.func @transform_0(%arg0: i32, %arg1: i32) -> (i32, i32, i32) {
    %c0_i32 = arith.constant 0 : i32
    %c0_i32_0 = arith.constant 0 : i32
    return %arg0, %arg1, %c0_i32 : i32, i32, i32
  }
  func.func @transform_1(%arg0: i32, %arg1: i32) -> (i32, i32) {
    %c0_i32 = arith.constant 0 : i32
    %c0_i32_0 = arith.constant 0 : i32
    %c0_i32_1 = arith.constant 0 : i32
    return %c0_i32, %c0_i32_0 : i32, i32
  }
  func.func @transform_2(%arg0: i32, %arg1: i32) -> (i32, i32) {
    %c0_i32 = arith.constant 0 : i32
    %c0_i32_0 = arith.constant 0 : i32
    %c0_i32_1 = arith.constant 0 : i32
    return %c0_i32, %c0_i32_0 : i32, i32
  }
  func.func @transform_3(%arg0: i32, %arg1: i32) -> i32 {
    %c0_i32 = arith.constant 0 : i32
    %c0_i32_0 = arith.constant 0 : i32
    return %c0_i32 : i32
  }
  func.func @transform_4(%arg0: i32, %arg1: i32) -> i32 {
    %c0_i32 = arith.constant 0 : i32
    %c0_i32_0 = arith.constant 0 : i32
    return %c0_i32 : i32
  }
  func.func @transform_5(%arg0: i32, %arg1: i32) -> (i32, i32, i32) {
    %c0_i32 = arith.constant 0 : i32
    %c0_i32_0 = arith.constant 0 : i32
    %c0_i32_1 = arith.constant 0 : i32
    return %arg0, %c0_i32, %c0_i32_0 : i32, i32, i32
  }
}

</mosaic_0001>

<llo_original>
// kernel: tpu_custom_call.1
$region0: #{tpu_custom_call.1}
  #allocation0 [shape = 'u32[]', space=smem, size = 0x4, offset = 0x4, fixed_abs, tag = 'smem constant byte address 0x4 - core index']
  #allocation1 [shape = 'u32[144,128]{1,0:T(1,128)}', space=vmem, size = 0x12000, scoped, tag = 'internal scratch']
  #allocation2 [shape = 'f32[1,256]{1,0:T(1,128)}', space=vmem, size = 0x400, scoped, tag = 'scratch operand']
  #allocation3 [shape = 'f32[1,256]{1,0:T(1,128)}', space=vmem, size = 0x400, scoped, tag = 'scratch operand']
  #allocation4 [shape = 'f32[1]{0:T(128)S(6)}', space=smem, size = 0x200, scoped, tag = 'scoped memory for tpu_custom_call.1']
  %s0 = inlined_call_operand.hbm [shape: f32[2,4,256], index: 0, kind: input, shape index: {}]
  %s1 = inlined_call_operand.vmem [shape: s32[1,256], index: 1, kind: input, shape index: {}]
  %s2 = inlined_call_operand.vmem [shape: s32[1,256], index: 2, kind: input, shape index: {}]
  %s3 = inlined_call_operand.vmem [shape: f32[98], index: 3, kind: input, shape index: {}]
  %s4 = inlined_call_operand.<no memory space> [shape: f32[1], index: 4, kind: input, shape index: {}]
  %s5 = inlined_call_operand.hbm [shape: f32[2,1,256], index: 5, kind: output, shape index: {}]
  %s6 = sld [smem:[#allocation0]]
  $region69: #{tpu_custom_call.1} parent=0
    _
  %s8 = ssub.s32 1, %s6
  %s9 = scalar_select 0, %s8, %s6
  %10 = sst [smem:[#allocation4]] %s4
  $region1: #{tpu_custom_call.1} parent=0
    #allocation5 [shape = 'u8[8192]{0}', space=vmem, size = 0x2000, scoped, tag = 'input window, operand 0']
    #allocation6 [shape = 's32[2]{0}', space=sflag, size = 0x8, scoped, tag = 'scoped memory for tpu_custom_call.1']
    #allocation7 [shape = 's32[2]{0}', space=sflag, size = 0x8, scoped, tag = 'scoped memory for tpu_custom_call.1']
    #allocation8 [shape = 's32[2]{0}', space=sflag, size = 0x8, scoped, tag = 'scoped memory for tpu_custom_call.1']
    #allocation9 [shape = 'u8[512]{0}', space=smem, size = 0x200, scoped, tag = 'input window, operand 3, single buffered']
    #allocation10 [shape = 'u8[2048]{0}', space=vmem, size = 0x800, scoped, tag = 'output window, operand 0']
    %11 = vsyncpa [#allocation6], 0
    %s12 = scalar_lea.sflag [#allocation6], 1
    %13 = vsyncpa %s12, 0
    %14 = vsyncpa [#allocation8], 0
    %15 = vsyncpa [#allocation7], 0
    %s16 = scalar_lea.sflag [#allocation7], 1
    %17 = vsyncpa %s16, 0
    loop: start=0, step=1, limit=4
    $region2: #{tpu_custom_call.1} parent=1 // loop_pre_header
      _
    $region3: #{tpu_custom_call.1} parent=1 // loop_header
      %s19 = sphi 0, %s23
      %p20 = scmp.ge.s32.totalorder %s19, 4
      %s26 = sphi 0, %s38
      %s27 = sphi 0, %s34
      %s28 = sphi 0, %s26
      %s29 = sphi 0, %s27
      %s30 = sphi 0, %s28
      %s31 = sphi 0, %s29
      %s43 = sphi 0, %s45
      %s46 = sphi 0, %s43
      %s47 = sphi 0, %s46
      %s63 = sphi 0, %s47
      %s67 = sphi 0, %s67
      %s69 = sphi 0, %s67
      %s70 = sphi 0, %s69
      %s84 = sphi 0, %s70
      %s88 = sphi 0, %s88
      %s90 = sphi 0, %s88
      %s91 = sphi 0, %s90
      %s105 = sphi 0, %s91
      %s109 = sphi 0, %s109
      %s111 = sphi 0, %s109
      %s112 = sphi 0, %s111
      %s126 = sphi 0, %s112
      %s130 = sphi 0, %s130
      %s132 = sphi 0, %s130
      %s133 = sphi 0, %s132
      %s147 = sphi 0, %s133
      %s153 = sphi 0, %s155
      %s156 = sphi 0, %s153
      %s157 = sphi 0, %s156
      %s173 = sphi 0, %s157
    $region4: #{tpu_custom_call.1} parent=1 // loop_header_branch
      %22 = sbr.rel (%p20) target = $region8
    $region5: #{tpu_custom_call.1} parent=1 // loop_body
      %s24 = ssub.s32 %s19, 1
      %s25 = ssub.s32 %s19, 2
      %s32 = sadd.s32 1, %s27
      %p33 = scmp.ge.s32.totalorder %s32, 1
      %s34 = scalar_select %p33, 0, %s32
      %s35 = sadd.s32 1, %s26
      %s36 = scalar_select %p33, %s35, %s26
      %p37 = scmp.ge.s32.totalorder %s36, 2
      %s38 = scalar_select %p37, 0, %s36
      %s39 = ssub.s32 %s26, %s38
      %s40 = ssub.s32 %s27, %s34
      %s41 = sor.u32 %s39, %s40
      %p42 = scmp.eq.s32.totalorder %s41, 0
      %s44 = sadd.s32 %s43, 1
      %s45 = scalar_select %p42, %s43, %s44
      %p48 = pneg %p42
      %p49 = scmp.eq.s32.totalorder %s19, 1
      %p50 = por %p48, %p49
      %p51 = scmp.ne.s32.totalorder %s43, %s46
      %p52 = scmp.eq.s32.totalorder %s19, 0
      %p53 = por %p51, %p52
      %p54 = scmp.ne.s32.totalorder %s43, %s46
      %p55 = scmp.eq.s32.totalorder %s24, 1
      %p56 = por %p54, %p55
      %p57 = scmp.ne.s32.totalorder %s46, %s47
      %p58 = scmp.eq.s32.totalorder %s24, 0
      %p59 = por %p57, %p58
      %p60 = scmp.ne.s32.totalorder %s46, %s47
      %p61 = scmp.eq.s32.totalorder %s25, 1
      %p62 = por %p60, %p61
      %p64 = scmp.ne.s32.totalorder %s47, %s63
      %p65 = scmp.eq.s32.totalorder %s25, 0
      %p66 = por %p64, %p65
      %s68 = sadd.s32 %s67, 1
      %p71 = scmp.eq.s32.totalorder %s19, 1
      %p72 = scmp.ne.s32.totalorder %s67, %s69
      %p73 = scmp.eq.s32.totalorder %s19, 0
      %p74 = por %p72, %p73
      %p75 = scmp.ne.s32.totalorder %s67, %s69
      %p76 = scmp.eq.s32.totalorder %s24, 1
      %p77 = por %p75, %p76
      %p78 = scmp.ne.s32.totalorder %s69, %s70
      %p79 = scmp.eq.s32.totalorder %s24, 0
      %p80 = por %p78, %p79
      %p81 = scmp.ne.s32.totalorder %s69, %s70
      %p82 = scmp.eq.s32.totalorder %s25, 1
      %p83 = por %p81, %p82
      %p85 = scmp.ne.s32.totalorder %s70, %s84
      %p86 = scmp.eq.s32.totalorder %s25, 0
      %p87 = por %p85, %p86
      %s89 = sadd.s32 %s88, 1
      %p92 = scmp.eq.s32.totalorder %s19, 1
      %p93 = scmp.ne.s32.totalorder %s88, %s90
      %p94 = scmp.eq.s32.totalorder %s19, 0
      %p95 = por %p93, %p94
      %p96 = scmp.ne.s32.totalorder %s88, %s90
      %p97 = scmp.eq.s32.totalorder %s24, 1
      %p98 = por %p96, %p97
      %p99 = scmp.ne.s32.totalorder %s90, %s91
      %p100 = scmp.eq.s32.totalorder %s24, 0
      %p101 = por %p99, %p100
      %p102 = scmp.ne.s32.totalorder %s90, %s91
      %p103 = scmp.eq.s32.totalorder %s25, 1
      %p104 = por %p102, %p103
      %p106 = scmp.ne.s32.totalorder %s91, %s105
      %p107 = scmp.eq.s32.totalorder %s25, 0
      %p108 = por %p106, %p107
      %s110 = sadd.s32 %s109, 1
      %p113 = scmp.eq.s32.totalorder %s19, 1
      %p114 = scmp.ne.s32.totalorder %s109, %s111
      %p115 = scmp.eq.s32.totalorder %s19, 0
      %p116 = por %p114, %p115
      %p117 = scmp.ne.s32.totalorder %s109, %s111
      %p118 = scmp.eq.s32.totalorder %s24, 1
      %p119 = por %p117, %p118
      %p120 = scmp.ne.s32.totalorder %s111, %s112
      %p121 = scmp.eq.s32.totalorder %s24, 0
      %p122 = por %p120, %p121
      %p123 = scmp.ne.s32.totalorder %s111, %s112
      %p124 = scmp.eq.s32.totalorder %s25, 1
      %p125 = por %p123, %p124
      %p127 = scmp.ne.s32.totalorder %s112, %s126
      %p128 = scmp.eq.s32.totalorder %s25, 0
      %p129 = por %p127, %p128
      %s131 = sadd.s32 %s130, 1
      %p134 = scmp.eq.s32.totalorder %s19, 1
      %p135 = scmp.ne.s32.totalorder %s130, %s132
      %p136 = scmp.eq.s32.totalorder %s19, 0
      %p137 = por %p135, %p136
      %p138 = scmp.ne.s32.totalorder %s130, %s132
      %p139 = scmp.eq.s32.totalorder %s24, 1
      %p140 = por %p138, %p139
      %p141 = scmp.ne.s32.totalorder %s132, %s133
      %p142 = scmp.eq.s32.totalorder %s24, 0
      %p143 = por %p141, %p142
      %p144 = scmp.ne.s32.totalorder %s132, %s133
      %p145 = scmp.eq.s32.totalorder %s25, 1
      %p146 = por %p144, %p145
      %p148 = scmp.ne.s32.totalorder %s133, %s147
      %p149 = scmp.eq.s32.totalorder %s25, 0
      %p150 = por %p148, %p149
      %s151 = ssub.s32 %s26, %s38
      %p152 = scmp.eq.s32.totalorder %s151, 0
      %s154 = sadd.s32 %s153, 1
      %s155 = scalar_select %p152, %s153, %s154
      %p158 = pneg %p152
      %p159 = scmp.eq.s32.totalorder %s19, 1
      %p160 = por %p158, %p159
      %p161 = scmp.ne.s32.totalorder %s153, %s156
      %p162 = scmp.eq.s32.totalorder %s19, 0
      %p163 = por %p161, %p162
      %p164 = scmp.ne.s32.totalorder %s153, %s156
      %p165 = scmp.eq.s32.totalorder %s24, 1
      %p166 = por %p164, %p165
      %p167 = scmp.ne.s32.totalorder %s156, %s157
      %p168 = scmp.eq.s32.totalorder %s24, 0
      %p169 = por %p167, %p168
      %p170 = scmp.ne.s32.totalorder %s156, %s157
      %p171 = scmp.eq.s32.totalorder %s25, 1
      %p172 = por %p170, %p171
      %p174 = scmp.ne.s32.totalorder %s157, %s173
      %p175 = scmp.eq.s32.totalorder %s25, 0
      %p176 = por %p174, %p175
      %p177 = scmp.le.s32.totalorder 1, %s19
      %p178 = scmp.lt.s32.totalorder %s19, 3
      %p179 = pnand %p177, %p178
      %p180 = pneg %p179
      // Predicated region
      $region9: #{tpu_custom_call.1} parent=5 // pred_check
        _
      $region10: #{tpu_custom_call.1} parent=5 // pred_check_branch
        %182 = sbr.rel (%p179) target = $region12
      $region11: #{tpu_custom_call.1} parent=5 // pred_region
        %s183 = ssub.s32 %s19, 1
        // Predicated region
        $region13: #{tpu_custom_call.1} parent=11 // pred_check
          %p184 = pneg %p80
        $region14: #{tpu_custom_call.1} parent=11 // pred_check_branch
          %186 = sbr.rel (%p184) target = $region16
        $region15: #{tpu_custom_call.1} parent=11 // pred_region
          _
        $region16: #{tpu_custom_call.1} parent=11 // pred_fallthru
          _
        // Predicated region
        $region17: #{tpu_custom_call.1} parent=11 // pred_check
          %p187 = pneg %p101
        $region18: #{tpu_custom_call.1} parent=11 // pred_check_branch
          %189 = sbr.rel (%p187) target = $region20
        $region19: #{tpu_custom_call.1} parent=11 // pred_region
          _
        $region20: #{tpu_custom_call.1} parent=11 // pred_fallthru
          _
        // Predicated region
        $region21: #{tpu_custom_call.1} parent=11 // pred_check
          %p190 = pneg %p122
        $region22: #{tpu_custom_call.1} parent=11 // pred_check_branch
          %192 = sbr.rel (%p190) target = $region24
        $region23: #{tpu_custom_call.1} parent=11 // pred_region
          %s194 = ssub.s32 16, 16
          %195 = vsyncadd [#allocation8], %s194
          %s197 = sshll.u32 %s3, 4
          %s198 = int_to_ptr.vmem [resolvable:$true] %s197
          %200 = dma.vmem_to_smem %s198, 16, [#allocation9], [#allocation8]
        $region24: #{tpu_custom_call.1} parent=11 // pred_fallthru
          _
        // Predicated region
        $region25: #{tpu_custom_call.1} parent=11 // pred_check
          %p201 = pneg %p143
        $region26: #{tpu_custom_call.1} parent=11 // pred_check_branch
          %203 = sbr.rel (%p201) target = $region28
        $region27: #{tpu_custom_call.1} parent=11 // pred_region
          _
        $region28: #{tpu_custom_call.1} parent=11 // pred_fallthru
          _
      $region12: #{tpu_custom_call.1} parent=5 // pred_fallthru
        _
      %p204 = scmp.lt.s32.totalorder %s19, 2
      // Predicated region
      $region29: #{tpu_custom_call.1} parent=5 // pred_check
        %p205 = pneg %p204
      $region30: #{tpu_custom_call.1} parent=5 // pred_check_branch
        %207 = sbr.rel (%p205) target = $region32
      $region31: #{tpu_custom_call.1} parent=5 // pred_region
        // Predicated region
        $region33: #{tpu_custom_call.1} parent=31 // pred_check
          %p208 = pneg %p53
        $region34: #{tpu_custom_call.1} parent=31 // pred_check_branch
          %210 = sbr.rel (%p208) target = $region36
        $region35: #{tpu_custom_call.1} parent=31 // pred_region
          %s211 = sand.u32 %s43, 1
          %s212 = scalar_lea.sflag [#allocation6], %s211
          %s213 = sand.u32 %s43, 1
          %s214 = smul.addr %s213, 8
          %s215 = scalar_lea.vmem [#allocation5], %s214
          %s217 = ssub.s32 128, 128
          %218 = vsyncadd %s212, %s217
          %s219 = smul.addr %s27, 2
          %s220 = smul.addr %s26, 2
          %s221 = sadd.s32 %s219, %s220
          %s222 = smul.addr %s221, 64
          %s223 = scalar_lea.hbm %s0, %s222
          %s225 = sshll.u32 %s215, 4
          %s226 = int_to_ptr.vmem [resolvable:$true] %s225
          %228 = dma.hbm_to_vmem [thread:$0]  %s223, 128, %s226, %s212
        $region36: #{tpu_custom_call.1} parent=31 // pred_fallthru
          _
      $region32: #{tpu_custom_call.1} parent=5 // pred_fallthru
        _
      %p229 = scmp.le.s32.totalorder 1, %s19
      %p230 = scmp.lt.s32.totalorder %s19, 3
      %p231 = pnand %p229, %p230
      %p232 = pneg %p231
      // Predicated region
      $region37: #{tpu_custom_call.1} parent=5 // pred_check
        _
      $region38: #{tpu_custom_call.1} parent=5 // pred_check_branch
        %234 = sbr.rel (%p231) target = $region40
      $region39: #{tpu_custom_call.1} parent=5 // pred_region
        %s235 = ssub.s32 %s19, 1
        %s236 = sand.u32 %s46, 1
        %s237 = scalar_lea.sflag [#allocation6], %s236
        %s238 = sand.u32 %s46, 1
        %s239 = smul.addr %s238, 8
        %s240 = scalar_lea.vmem [#allocation5], %s239
        // Predicated region
        $region41: #{tpu_custom_call.1} parent=39 // pred_check
          %p241 = pneg %p59
        $region42: #{tpu_custom_call.1} parent=39 // pred_check_branch
          %243 = sbr.rel (%p241) target = $region44
        $region43: #{tpu_custom_call.1} parent=39 // pred_region
          %244 = dma.done %s237, 128
        $region44: #{tpu_custom_call.1} parent=39 // pred_fallthru
          _
        // Predicated region
        $region45: #{tpu_custom_call.1} parent=39 // pred_check
          %p245 = pneg %p122
        $region46: #{tpu_custom_call.1} parent=39 // pred_check_branch
          %247 = sbr.rel (%p245) target = $region48
        $region47: #{tpu_custom_call.1} parent=39 // pred_region
          %248 = dma.done [#allocation8], 16
        $region48: #{tpu_custom_call.1} parent=39 // pred_fallthru
          _
        %249 = sfence
        %s250 = sand.u32 %s46, 1
        %s251 = scalar_lea.sflag [#allocation6], %s250
        %s252 = sand.u32 %s46, 1
        %s253 = smul.addr %s252, 8
        %s254 = scalar_lea.vmem [#allocation5], %s253
        %p255 = pneg %p59
        %p256 = pneg %p56
        %p257 = pneg %p80
        %p258 = pneg %p77
        %p259 = pneg %p101
        %p260 = pneg %p98
        %p261 = pneg %p122
        %p262 = pneg %p119
        %p263 = pneg %p143
        %p264 = pneg %p140
        %p265 = pneg %p169
        %p266 = pneg %p166
        %s267 = sand.u32 %s156, 1
        %s268 = scalar_lea.sflag [#allocation7], %s267
        %s269 = sand.u32 %s156, 1
        %s270 = smul.addr %s269, 2
        %s271 = scalar_lea.vmem [#allocation10], %s270
        %p272 = scmp.eq.s32.totalorder %s29, 0
        // Predicated region
        $region49: #{tpu_custom_call.1} parent=39 // pred_check
          %p273 = pneg %p272
        $region50: #{tpu_custom_call.1} parent=39 // pred_check_branch
          %275 = sbr.rel (%p273) target = $region52
        $region51: #{tpu_custom_call.1} parent=39 // pred_region
          %v276 = vlaneseq
          %vm277 = vcmp.ge.s32.totalorder %v276, 0
          %vm278 = vcmp.lt.s32.totalorder %v276, 256
          %vm279 = vmand %vm277, %vm278
          %280 = vst.msk [vmem:[#allocation2] sm:$0x3] %vm279, 0.0
          %281 = vst.msk [vmem:[#allocation3] sm:$0x3] %vm279, -inf
        $region52: #{tpu_custom_call.1} parent=39 // pred_fallthru
          _
        %v282 = vld [vmem:[%s240] ss:$4 sm:$0x3]
        %s283 = scalar_lea.vmem %s240, 1 [#allocation5]
        %v284 = vld [vmem:[%s283] ss:$4 sm:$0x3]
        %v285 = vadd.f32 %v282, %v284
        %v286 = vmax.f32 %v282, %v284
        %s287 = scalar_lea.vmem %s240, 2 [#allocation5]
        %v288 = vld [vmem:[%s287] ss:$4 sm:$0x3]
        %v289 = vadd.f32 %v285, %v288
        %v290 = vmax.f32 %v286, %v288
        %s291 = scalar_lea.vmem %s240, 3 [#allocation5]
        %v292 = vld [vmem:[%s291] ss:$4 sm:$0x3]
        %v293 = vadd.f32 %v289, %v292
        %v294 = vmax.f32 %v290, %v292
        %v295 = vld [vmem:[#allocation2] sm:$0x3]
        %v296 = vadd.f32 %v295, %v293
        %v297 = vlaneseq
        %vm298 = vcmp.ge.s32.totalorder %v297, 0
        %vm299 = vcmp.lt.s32.totalorder %v297, 256
        %vm300 = vmand %vm298, %vm299
        %301 = vst.msk [vmem:[#allocation2] sm:$0x3] %vm300, %v296
        %v302 = vld [vmem:[#allocation3] sm:$0x3]
        %v303 = vmax.f32 %v302, %v294
        %304 = vst.msk [vmem:[#allocation3] sm:$0x3] %vm300, %v303
        // Predicated region
        $region53: #{tpu_custom_call.1} parent=39 // pred_check
          %p305 = pneg %p272
        $region54: #{tpu_custom_call.1} parent=39 // pred_check_branch
          %307 = sbr.rel (%p305) target = $region56
        $region55: #{tpu_custom_call.1} parent=39 // pred_region
          %s308 = sld [smem:[#allocation4]]
          %s309 = sld [smem:[#allocation9]]
          %s310 = sld [smem:[#allocation9 + $0x1]]
          %s311 = sld [smem:[#allocation9 + $0x2]]
          %s312 = sld [smem:[#allocation9 + $0x3]]
          %s313 = sld [smem:[#allocation9 + $0x4]]
          %s314 = sld [smem:[#allocation9 + $0x5]]
          %s315 = sld [smem:[#allocation9 + $0x6]]
          %s316 = sld [smem:[#allocation9 + $0x7]]
          %s317 = sld [smem:[#allocation9 + $0x8]]
          %s318 = sld [smem:[#allocation9 + $0x9]]
          %s319 = sld [smem:[#allocation9 + $0xa]]
          %s320 = sld [smem:[#allocation9 + $0xb]]
          %s321 = sld [smem:[#allocation9 + $0xc]]
          %s322 = sld [smem:[#allocation9 + $0xd]]
          %s323 = sld [smem:[#allocation9 + $0xe]]
          %s324 = sld [smem:[#allocation9 + $0xf]]
          %s325 = sld [smem:[#allocation9 + $0x10]]
          %s326 = sld [smem:[#allocation9 + $0x11]]
          %s327 = sld [smem:[#allocation9 + $0x12]]
          %s328 = sld [smem:[#allocation9 + $0x13]]
          %s329 = sld [smem:[#allocation9 + $0x14]]
          %s330 = sld [smem:[#allocation9 + $0x15]]
          %s331 = sld [smem:[#allocation9 + $0x16]]
          %s332 = sld [smem:[#allocation9 + $0x17]]
          %s333 = sld [smem:[#allocation9 + $0x18]]
          %s334 = sld [smem:[#allocation9 + $0x19]]
          %s335 = sld [smem:[#allocation9 + $0x1a]]
          %s336 = sld [smem:[#allocation9 + $0x1b]]
          %s337 = sld [smem:[#allocation9 + $0x1c]]
          %s338 = sld [smem:[#allocation9 + $0x1d]]
          %s339 = sld [smem:[#allocation9 + $0x1e]]
          %s340 = sld [smem:[#allocation9 + $0x1f]]
          %s341 = sld [smem:[#allocation9 + $0x20]]
          %s342 = sld [smem:[#allocation9 + $0x21]]
          %s343 = sld [smem:[#allocation9 + $0x22]]
          %s344 = sld [smem:[#allocation9 + $0x23]]
          %s345 = sld [smem:[#allocation9 + $0x24]]
          %s346 = sld [smem:[#allocation9 + $0x25]]
          %s347 = sld [smem:[#allocation9 + $0x26]]
          %s348 = sld [smem:[#allocation9 + $0x27]]
          %s349 = sld [smem:[#allocation9 + $0x28]]
          %s350 = sld [smem:[#allocation9 + $0x29]]
          %s351 = sld [smem:[#allocation9 + $0x2a]]
          %s352 = sld [smem:[#allocation9 + $0x2b]]
          %s353 = sld [smem:[#allocation9 + $0x2c]]
          %s354 = sld [smem:[#allocation9 + $0x2d]]
          %s355 = sld [smem:[#allocation9 + $0x2e]]
          %s356 = sld [smem:[#allocation9 + $0x2f]]
          %s357 = sld [smem:[#allocation9 + $0x30]]
          %s358 = sld [smem:[#allocation9 + $0x31]]
          %s359 = sld [smem:[#allocation9 + $0x32]]
          %s360 = sld [smem:[#allocation9 + $0x33]]
          %s361 = sld [smem:[#allocation9 + $0x34]]
          %s362 = sld [smem:[#allocation9 + $0x35]]
          %s363 = sld [smem:[#allocation9 + $0x36]]
          %s364 = sld [smem:[#allocation9 + $0x37]]
          %s365 = sld [smem:[#allocation9 + $0x38]]
          %s366 = sld [smem:[#allocation9 + $0x39]]
          %s367 = sld [smem:[#allocation9 + $0x3a]]
          %s368 = sld [smem:[#allocation9 + $0x3b]]
          %s369 = sld [smem:[#allocation9 + $0x3c]]
          %s370 = sld [smem:[#allocation9 + $0x3d]]
          %s371 = sld [smem:[#allocation9 + $0x3e]]
          %s372 = sld [smem:[#allocation9 + $0x3f]]
          %s373 = sld [smem:[#allocation9 + $0x40]]
          %s374 = sld [smem:[#allocation9 + $0x41]]
          %s375 = sld [smem:[#allocation9 + $0x42]]
          %s376 = sld [smem:[#allocation9 + $0x43]]
          %s377 = sld [smem:[#allocation9 + $0x44]]
          %s378 = sld [smem:[#allocation9 + $0x45]]
          %s379 = sld [smem:[#allocation9 + $0x46]]
          %s380 = sld [smem:[#allocation9 + $0x47]]
          %s381 = sld [smem:[#allocation9 + $0x48]]
          %s382 = sld [smem:[#allocation9 + $0x49]]
          %s383 = sld [smem:[#allocation9 + $0x4a]]
          %s384 = sld [smem:[#allocation9 + $0x4b]]
          %s385 = sld [smem:[#allocation9 + $0x4c]]
          %s386 = sld [smem:[#allocation9 + $0x4d]]
          %s387 = sld [smem:[#allocation9 + $0x4e]]
          %s388 = sld [smem:[#allocation9 + $0x4f]]
          %s389 = sld [smem:[#allocation9 + $0x50]]
          %s390 = sld [smem:[#allocation9 + $0x51]]
          %s391 = sld [smem:[#allocation9 + $0x52]]
          %s392 = sld [smem:[#allocation9 + $0x53]]
          %s393 = sld [smem:[#allocation9 + $0x54]]
          %s394 = sld [smem:[#allocation9 + $0x55]]
          %s395 = sld [smem:[#allocation9 + $0x56]]
          %s396 = sld [smem:[#allocation9 + $0x57]]
          %s397 = sld [smem:[#allocation9 + $0x58]]
          %s398 = sld [smem:[#allocation9 + $0x59]]
          %s399 = sld [smem:[#allocation9 + $0x5a]]
          %s400 = sld [smem:[#allocation9 + $0x5b]]
          %s401 = sld [smem:[#allocation9 + $0x5c]]
          %s402 = sld [smem:[#allocation9 + $0x5d]]
          %s403 = sld [smem:[#allocation9 + $0x5e]]
          %s404 = sld [smem:[#allocation9 + $0x5f]]
          %s405 = sld [smem:[#allocation9 + $0x60]]
          %s406 = sld [smem:[#allocation9 + $0x61]]
          %v407 = vld [vmem:[%s1] sm:$0x3]
          %v408 = vld [vmem:[%s2] sm:$0x3]
          %v409 = vld [vmem:[#allocation2] sm:$0x3]
          %v410 = vmul.f32 %v409, 0.25
          %v411 = vld [vmem:[#allocation3] sm:$0x3]
          %v413 = vlaneseq
          %v414 = vshrl.u32 %v413, 7
          %v415 = vsub.s32 0, %v414
          %v416 = vrot.slane %v410, %v415
          %v417 = vlaneseq
          %v418 = vshrl.u32 %v417, 7
          %v419 = vsub.s32 1, %v418
          %v420 = vrot.slane %v410, %v419
          %423 = vrot.lane.b32.xlu0 %v416, 3
          %v424 = vpop.permute.xlu0 %423
          %425 = vrot.lane.b32.xlu0 %v420, 3
          %v426 = vpop.permute.xlu0 %425
          %v427 = vlaneseq
          %v428 = vand.u32 %v427, 127
          %vm429 = vcmp.lt.s32.totalorder %v428, 3
          %v430 = vsel %vm429, %v424, %v426
          %v431 = vsel %vm429, %v426, %v424
          %vm432 = vcmp.ge.s32.totalorder %v407, 3
          %v435 = vcombine.low %v431, %v430
          %v437 = vunpack.c.l.s4 1966171168
          %v438 = vunpack.c.0.s8 %v437
          %v439 = vlaneseq
          %v440 = vshrl.u32 %v439, 7
          %v441 = vsub.s32 %v438, %v440
          %v442 = vrot.slane %v435, %v441
          %v444 = vunpack.c.l.s4 1966171168
          %v445 = vunpack.c.0.s8 %v444
          %v446 = vlaneseq
          %v447 = vshrl.u32 %v446, 7
          %v448 = vsub.s32 %v445, %v447
          %v449 = vrot.slane %v442, %v448
          %v451 = vsel %vm432, %v449, 0.0
          %452 = vrot.lane.b32.xlu0 %v416, 2
          %v453 = vpop.permute.xlu0 %452
          %454 = vrot.lane.b32.xlu0 %v420, 2
          %v455 = vpop.permute.xlu0 %454
          %vm456 = vcmp.lt.s32.totalorder %v428, 2
          %v457 = vsel %vm456, %v453, %v455
          %v458 = vsel %vm456, %v455, %v453
          %vm459 = vcmp.ge.s32.totalorder %v407, 2
          %v462 = vcombine.low %v458, %v457
          %v464 = vunpack.c.l.s4 1966171168
          %v465 = vunpack.c.0.s8 %v464
          %v466 = vlaneseq
          %v467 = vshrl.u32 %v466, 7
          %v468 = vsub.s32 %v465, %v467
          %v469 = vrot.slane %v462, %v468
          %v471 = vunpack.c.l.s4 1966171168
          %v472 = vunpack.c.0.s8 %v471
          %v473 = vlaneseq
          %v474 = vshrl.u32 %v473, 7
          %v475 = vsub.s32 %v472, %v474
          %v476 = vrot.slane %v469, %v475
          %v478 = vsel %vm459, %v476, 0.0
          %479 = vrot.lane.b32.xlu0 %v416, 1
          %v480 = vpop.permute.xlu0 %479
          %481 = vrot.lane.b32.xlu0 %v420, 1
          %v482 = vpop.permute.xlu0 %481
          %vm483 = vcmp.lt.s32.totalorder %v428, 1
          %v484 = vsel %vm483, %v480, %v482
          %v485 = vsel %vm483, %v482, %v480
          %vm486 = vcmp.ge.s32.totalorder %v407, 1
          %v489 = vcombine.low %v485, %v484
          %v491 = vunpack.c.l.s4 1966171168
          %v492 = vunpack.c.0.s8 %v491
          %v493 = vlaneseq
          %v494 = vshrl.u32 %v493, 7
          %v495 = vsub.s32 %v492, %v494
          %v496 = vrot.slane %v489, %v495
          %v498 = vunpack.c.l.s4 1966171168
          %v499 = vunpack.c.0.s8 %v498
          %v500 = vlaneseq
          %v501 = vshrl.u32 %v500, 7
          %v502 = vsub.s32 %v499, %v501
          %v503 = vrot.slane %v496, %v502
          %v505 = vsel %vm486, %v503, 0.0
          %506 = vrot.lane.b32.xlu0 %v416, 127
          %v507 = vpop.permute.xlu0 %506
          %508 = vrot.lane.b32.xlu0 %v420, 127
          %v509 = vpop.permute.xlu0 %508
          %vm510 = vcmp.lt.s32.totalorder %v428, 127
          %v511 = vsel %vm510, %v507, %v509
          %v512 = vsel %vm510, %v509, %v507
          %vm513 = vcmp.lt.s32.totalorder %v407, 15
          %v516 = vcombine.low %v511, %v512
          %v518 = vunpack.c.l.s4 1966171168
          %v519 = vunpack.c.0.s8 %v518
          %v520 = vlaneseq
          %v521 = vshrl.u32 %v520, 7
          %v522 = vsub.s32 %v519, %v521
          %v523 = vrot.slane %v516, %v522
          %v525 = vunpack.c.l.s4 1966171168
          %v526 = vunpack.c.0.s8 %v525
          %v527 = vlaneseq
          %v528 = vshrl.u32 %v527, 7
          %v529 = vsub.s32 %v526, %v528
          %v530 = vrot.slane %v523, %v529
          %v532 = vsel %vm513, %v530, 0.0
          %533 = vrot.lane.b32.xlu0 %v416, 126
          %v534 = vpop.permute.xlu0 %533
          %535 = vrot.lane.b32.xlu0 %v420, 126
          %v536 = vpop.permute.xlu0 %535
          %vm537 = vcmp.lt.s32.totalorder %v428, 126
          %v538 = vsel %vm537, %v534, %v536
          %v539 = vsel %vm537, %v536, %v534
          %vm540 = vcmp.lt.s32.totalorder %v407, 14
          %v543 = vcombine.low %v538, %v539
          %v545 = vunpack.c.l.s4 1966171168
          %v546 = vunpack.c.0.s8 %v545
          %v547 = vlaneseq
          %v548 = vshrl.u32 %v547, 7
          %v549 = vsub.s32 %v546, %v548
          %v550 = vrot.slane %v543, %v549
          %v552 = vunpack.c.l.s4 1966171168
          %v553 = vunpack.c.0.s8 %v552
          %v554 = vlaneseq
          %v555 = vshrl.u32 %v554, 7
          %v556 = vsub.s32 %v553, %v555
          %v557 = vrot.slane %v550, %v556
          %v559 = vsel %vm540, %v557, 0.0
          %560 = vrot.lane.b32.xlu0 %v416, 125
          %v561 = vpop.permute.xlu0 %560
          %562 = vrot.lane.b32.xlu0 %v420, 125
          %v563 = vpop.permute.xlu0 %562
          %vm564 = vcmp.lt.s32.totalorder %v428, 125
          %v565 = vsel %vm564, %v561, %v563
          %v566 = vsel %vm564, %v563, %v561
          %vm567 = vcmp.lt.s32.totalorder %v407, 13
          %v570 = vcombine.low %v565, %v566
          %v572 = vunpack.c.l.s4 1966171168
          %v573 = vunpack.c.0.s8 %v572
          %v574 = vlaneseq
          %v575 = vshrl.u32 %v574, 7
          %v576 = vsub.s32 %v573, %v575
          %v577 = vrot.slane %v570, %v576
          %v579 = vunpack.c.l.s4 1966171168
          %v580 = vunpack.c.0.s8 %v579
          %v581 = vlaneseq
          %v582 = vshrl.u32 %v581, 7
          %v583 = vsub.s32 %v580, %v582
          %v584 = vrot.slane %v577, %v583
          %v586 = vsel %vm567, %v584, 0.0
          %v588 = vlaneseq
          %v589 = vshrl.u32 %v588, 7
          %v590 = vsub.s32 0, %v589
          %v591 = vrot.slane %v411, %v590
          %v592 = vlaneseq
          %v593 = vshrl.u32 %v592, 7
          %v594 = vsub.s32 1, %v593
          %v595 = vrot.slane %v411, %v594
          %598 = vrot.lane.b32.xlu0 %v591, 3
          %v599 = vpop.permute.xlu0 %598
          %600 = vrot.lane.b32.xlu0 %v595, 3
          %v601 = vpop.permute.xlu0 %600
          %v602 = vsel %vm429, %v599, %v601
          %v603 = vsel %vm429, %v601, %v599
          %v606 = vcombine.low %v603, %v602
          %v608 = vunpack.c.l.s4 1966171168
          %v609 = vunpack.c.0.s8 %v608
          %v610 = vlaneseq
          %v611 = vshrl.u32 %v610, 7
          %v612 = vsub.s32 %v609, %v611
          %v613 = vrot.slane %v606, %v612
          %v615 = vunpack.c.l.s4 1966171168
          %v616 = vunpack.c.0.s8 %v615
          %v617 = vlaneseq
          %v618 = vshrl.u32 %v617, 7
          %v619 = vsub.s32 %v616, %v618
          %v620 = vrot.slane %v613, %v619
          %v622 = vsel %vm432, %v620, 0.0
          %623 = vrot.lane.b32.xlu0 %v591, 2
          %v624 = vpop.permute.xlu0 %623
          %625 = vrot.lane.b32.xlu0 %v595, 2
          %v626 = vpop.permute.xlu0 %625
          %v627 = vsel %vm456, %v624, %v626
          %v628 = vsel %vm456, %v626, %v624
          %v631 = vcombine.low %v628, %v627
          %v633 = vunpack.c.l.s4 1966171168
          %v634 = vunpack.c.0.s8 %v633
          %v635 = vlaneseq
          %v636 = vshrl.u32 %v635, 7
          %v637 = vsub.s32 %v634, %v636
          %v638 = vrot.slane %v631, %v637
          %v640 = vunpack.c.l.s4 1966171168
          %v641 = vunpack.c.0.s8 %v640
          %v642 = vlaneseq
          %v643 = vshrl.u32 %v642, 7
          %v644 = vsub.s32 %v641, %v643
          %v645 = vrot.slane %v638, %v644
          %v647 = vsel %vm459, %v645, 0.0
          %648 = vrot.lane.b32.xlu0 %v591, 1
          %v649 = vpop.permute.xlu0 %648
          %650 = vrot.lane.b32.xlu0 %v595, 1
          %v651 = vpop.permute.xlu0 %650
          %v652 = vsel %vm483, %v649, %v651
          %v653 = vsel %vm483, %v651, %v649
          %v656 = vcombine.low %v653, %v652
          %v658 = vunpack.c.l.s4 1966171168
          %v659 = vunpack.c.0.s8 %v658
          %v660 = vlaneseq
          %v661 = vshrl.u32 %v660, 7
          %v662 = vsub.s32 %v659, %v661
          %v663 = vrot.slane %v656, %v662
          %v665 = vunpack.c.l.s4 1966171168
          %v666 = vunpack.c.0.s8 %v665
          %v667 = vlaneseq
          %v668 = vshrl.u32 %v667, 7
          %v669 = vsub.s32 %v666, %v668
          %v670 = vrot.slane %v663, %v669
          %v672 = vsel %vm486, %v670, 0.0
          %673 = vrot.lane.b32.xlu0 %v591, 127
          %v674 = vpop.permute.xlu0 %673
          %675 = vrot.lane.b32.xlu0 %v595, 127
          %v676 = vpop.permute.xlu0 %675
          %v677 = vsel %vm510, %v674, %v676
          %v678 = vsel %vm510, %v676, %v674
          %v681 = vcombine.low %v677, %v678
          %v683 = vunpack.c.l.s4 1966171168
          %v684 = vunpack.c.0.s8 %v683
          %v685 = vlaneseq
          %v686 = vshrl.u32 %v685, 7
          %v687 = vsub.s32 %v684, %v686
          %v688 = vrot.slane %v681, %v687
          %v690 = vunpack.c.l.s4 1966171168
          %v691 = vunpack.c.0.s8 %v690
          %v692 = vlaneseq
          %v693 = vshrl.u32 %v692, 7
          %v694 = vsub.s32 %v691, %v693
          %v695 = vrot.slane %v688, %v694
          %v697 = vsel %vm513, %v695, 0.0
          %698 = vrot.lane.b32.xlu0 %v591, 126
          %v699 = vpop.permute.xlu0 %698
          %700 = vrot.lane.b32.xlu0 %v595, 126
          %v701 = vpop.permute.xlu0 %700
          %v702 = vsel %vm537, %v699, %v701
          %v703 = vsel %vm537, %v701, %v699
          %v706 = vcombine.low %v702, %v703
          %v708 = vunpack.c.l.s4 1966171168
          %v709 = vunpack.c.0.s8 %v708
          %v710 = vlaneseq
          %v711 = vshrl.u32 %v710, 7
          %v712 = vsub.s32 %v709, %v711
          %v713 = vrot.slane %v706, %v712
          %v715 = vunpack.c.l.s4 1966171168
          %v716 = vunpack.c.0.s8 %v715
          %v717 = vlaneseq
          %v718 = vshrl.u32 %v717, 7
          %v719 = vsub.s32 %v716, %v718
          %v720 = vrot.slane %v713, %v719
          %v722 = vsel %vm540, %v720, 0.0
          %723 = vrot.lane.b32.xlu0 %v591, 125
          %v724 = vpop.permute.xlu0 %723
          %725 = vrot.lane.b32.xlu0 %v595, 125
          %v726 = vpop.permute.xlu0 %725
          %v727 = vsel %vm564, %v724, %v726
          %v728 = vsel %vm564, %v726, %v724
          %v731 = vcombine.low %v727, %v728
          %v733 = vunpack.c.l.s4 1966171168
          %v734 = vunpack.c.0.s8 %v733
          %v735 = vlaneseq
          %v736 = vshrl.u32 %v735, 7
          %v737 = vsub.s32 %v734, %v736
          %v738 = vrot.slane %v731, %v737
          %v740 = vunpack.c.l.s4 1966171168
          %v741 = vunpack.c.0.s8 %v740
          %v742 = vlaneseq
          %v743 = vshrl.u32 %v742, 7
          %v744 = vsub.s32 %v741, %v743
          %v745 = vrot.slane %v738, %v744
          %v747 = vsel %vm567, %v745, 0.0
          %v748 = vstv %s309
          %v749 = vmul.f32 %v748, %v451
          %v750 = vstv %s310
          %v751 = vmul.f32 %v750, %v478
          %v752 = vstv %s311
          %v753 = vmul.f32 %v752, %v505
          %v754 = vadd.f32 %v749, %v753
          %v755 = vstv %s312
          %v756 = vmul.f32 %v755, %v410
          %v757 = vadd.f32 %v751, %v756
          %v758 = vstv %s313
          %v759 = vmul.f32 %v758, %v532
          %v760 = vadd.f32 %v754, %v759
          %v761 = vstv %s314
          %v762 = vmul.f32 %v761, %v559
          %v763 = vadd.f32 %v757, %v762
          %v764 = vstv %s315
          %v765 = vmul.f32 %v764, %v586
          %v766 = vadd.f32 %v760, %v765
          %v767 = vstv %s358
          %v768 = vmul.f32 %v767, %v622
          %v769 = vadd.f32 %v763, %v768
          %v770 = vstv %s359
          %v771 = vmul.f32 %v770, %v647
          %v772 = vadd.f32 %v766, %v771
          %v773 = vstv %s360
          %v774 = vmul.f32 %v773, %v672
          %v775 = vadd.f32 %v769, %v774
          %v776 = vstv %s361
          %v777 = vmul.f32 %v776, %v411
          %v778 = vadd.f32 %v772, %v777
          %v779 = vstv %s362
          %v780 = vmul.f32 %v779, %v697
          %v781 = vadd.f32 %v775, %v780
          %v782 = vstv %s363
          %v783 = vmul.f32 %v782, %v722
          %v784 = vadd.f32 %v778, %v783
          %v785 = vstv %s364
          %v786 = vmul.f32 %v785, %v747
          %v787 = vadd.f32 %v781, %v786
          %v788 = vadd.f32 %v784, %v787
          %v790 = vlaneseq
          %v791 = vshrl.u32 %v790, 7
          %v792 = vsub.s32 0, %v791
          %v793 = vrot.slane %v788, %v792
          %v794 = vlaneseq
          %v795 = vshrl.u32 %v794, 7
          %v796 = vsub.s32 1, %v795
          %v797 = vrot.slane %v788, %v796
          %800 = vrot.lane.b32.xlu0 %v793, 48
          %v801 = vpop.permute.xlu0 %800
          %802 = vrot.lane.b32.xlu0 %v797, 48
          %v803 = vpop.permute.xlu0 %802
          %vm804 = vcmp.lt.s32.totalorder %v428, 48
          %v805 = vsel %vm804, %v801, %v803
          %v806 = vsel %vm804, %v803, %v801
          %vm807 = vcmp.ge.s32.totalorder %v408, 3
          %v810 = vcombine.low %v806, %v805
          %v812 = vunpack.c.l.s4 1966171168
          %v813 = vunpack.c.0.s8 %v812
          %v814 = vlaneseq
          %v815 = vshrl.u32 %v814, 7
          %v816 = vsub.s32 %v813, %v815
          %v817 = vrot.slane %v810, %v816
          %v819 = vunpack.c.l.s4 1966171168
          %v820 = vunpack.c.0.s8 %v819
          %v821 = vlaneseq
          %v822 = vshrl.u32 %v821, 7
          %v823 = vsub.s32 %v820, %v822
          %v824 = vrot.slane %v817, %v823
          %v826 = vsel %vm807, %v824, 0.0
          %v827 = vstv %s316
          %v828 = vmul.f32 %v827, %v451
          %v829 = vstv %s317
          %v830 = vmul.f32 %v829, %v478
          %v831 = vstv %s318
          %v832 = vmul.f32 %v831, %v505
          %v833 = vadd.f32 %v828, %v832
          %v834 = vstv %s319
          %v835 = vmul.f32 %v834, %v410
          %v836 = vadd.f32 %v830, %v835
          %v837 = vstv %s320
          %v838 = vmul.f32 %v837, %v532
          %v839 = vadd.f32 %v833, %v838
          %v840 = vstv %s321
          %v841 = vmul.f32 %v840, %v559
          %v842 = vadd.f32 %v836, %v841
          %v843 = vstv %s322
          %v844 = vmul.f32 %v843, %v586
          %v845 = vadd.f32 %v839, %v844
          %v846 = vstv %s365
          %v847 = vmul.f32 %v846, %v622
          %v848 = vadd.f32 %v842, %v847
          %v849 = vstv %s366
          %v850 = vmul.f32 %v849, %v647
          %v851 = vadd.f32 %v845, %v850
          %v852 = vstv %s367
          %v853 = vmul.f32 %v852, %v672
          %v854 = vadd.f32 %v848, %v853
          %v855 = vstv %s368
          %v856 = vmul.f32 %v855, %v411
          %v857 = vadd.f32 %v851, %v856
          %v858 = vstv %s369
          %v859 = vmul.f32 %v858, %v697
          %v860 = vadd.f32 %v854, %v859
          %v861 = vstv %s370
          %v862 = vmul.f32 %v861, %v722
          %v863 = vadd.f32 %v857, %v862
          %v864 = vstv %s371
          %v865 = vmul.f32 %v864, %v747
          %v866 = vadd.f32 %v860, %v865
          %v867 = vadd.f32 %v863, %v866
          %v869 = vlaneseq
          %v870 = vshrl.u32 %v869, 7
          %v871 = vsub.s32 0, %v870
          %v872 = vrot.slane %v867, %v871
          %v873 = vlaneseq
          %v874 = vshrl.u32 %v873, 7
          %v875 = vsub.s32 1, %v874
          %v876 = vrot.slane %v867, %v875
          %879 = vrot.lane.b32.xlu0 %v872, 32
          %v880 = vpop.permute.xlu0 %879
          %881 = vrot.lane.b32.xlu0 %v876, 32
          %v882 = vpop.permute.xlu0 %881
          %vm883 = vcmp.lt.s32.totalorder %v428, 32
          %v884 = vsel %vm883, %v880, %v882
          %v885 = vsel %vm883, %v882, %v880
          %vm886 = vcmp.ge.s32.totalorder %v408, 2
          %v889 = vcombine.low %v885, %v884
          %v891 = vunpack.c.l.s4 1966171168
          %v892 = vunpack.c.0.s8 %v891
          %v893 = vlaneseq
          %v894 = vshrl.u32 %v893, 7
          %v895 = vsub.s32 %v892, %v894
          %v896 = vrot.slane %v889, %v895
          %v898 = vunpack.c.l.s4 1966171168
          %v899 = vunpack.c.0.s8 %v898
          %v900 = vlaneseq
          %v901 = vshrl.u32 %v900, 7
          %v902 = vsub.s32 %v899, %v901
          %v903 = vrot.slane %v896, %v902
          %v905 = vsel %vm886, %v903, 0.0
          %v906 = vadd.f32 %v826, %v905
          %v907 = vstv %s323
          %v908 = vmul.f32 %v907, %v451
          %v909 = vstv %s324
          %v910 = vmul.f32 %v909, %v478
          %v911 = vstv %s325
          %v912 = vmul.f32 %v911, %v505
          %v913 = vadd.f32 %v908, %v912
          %v914 = vstv %s326
          %v915 = vmul.f32 %v914, %v410
          %v916 = vadd.f32 %v910, %v915
          %v917 = vstv %s327
          %v918 = vmul.f32 %v917, %v532
          %v919 = vadd.f32 %v913, %v918
          %v920 = vstv %s328
          %v921 = vmul.f32 %v920, %v559
          %v922 = vadd.f32 %v916, %v921
          %v923 = vstv %s329
          %v924 = vmul.f32 %v923, %v586
          %v925 = vadd.f32 %v919, %v924
          %v926 = vstv %s372
          %v927 = vmul.f32 %v926, %v622
          %v928 = vadd.f32 %v922, %v927
          %v929 = vstv %s373
          %v930 = vmul.f32 %v929, %v647
          %v931 = vadd.f32 %v925, %v930
          %v932 = vstv %s374
          %v933 = vmul.f32 %v932, %v672
          %v934 = vadd.f32 %v928, %v933
          %v935 = vstv %s375
          %v936 = vmul.f32 %v935, %v411
          %v937 = vadd.f32 %v931, %v936
          %v938 = vstv %s376
          %v939 = vmul.f32 %v938, %v697
          %v940 = vadd.f32 %v934, %v939
          %v941 = vstv %s377
          %v942 = vmul.f32 %v941, %v722
          %v943 = vadd.f32 %v937, %v942
          %v944 = vstv %s378
          %v945 = vmul.f32 %v944, %v747
          %v946 = vadd.f32 %v940, %v945
          %v947 = vadd.f32 %v943, %v946
          %v949 = vlaneseq
          %v950 = vshrl.u32 %v949, 7
          %v951 = vsub.s32 0, %v950
          %v952 = vrot.slane %v947, %v951
          %v953 = vlaneseq
          %v954 = vshrl.u32 %v953, 7
          %v955 = vsub.s32 1, %v954
          %v956 = vrot.slane %v947, %v955
          %959 = vrot.lane.b32.xlu0 %v952, 16
          %v960 = vpop.permute.xlu0 %959
          %961 = vrot.lane.b32.xlu0 %v956, 16
          %v962 = vpop.permute.xlu0 %961
          %vm963 = vcmp.lt.s32.totalorder %v428, 16
          %v964 = vsel %vm963, %v960, %v962
          %v965 = vsel %vm963, %v962, %v960
          %vm966 = vcmp.ge.s32.totalorder %v408, 1
          %v969 = vcombine.low %v965, %v964
          %v971 = vunpack.c.l.s4 1966171168
          %v972 = vunpack.c.0.s8 %v971
          %v973 = vlaneseq
          %v974 = vshrl.u32 %v973, 7
          %v975 = vsub.s32 %v972, %v974
          %v976 = vrot.slane %v969, %v975
          %v978 = vunpack.c.l.s4 1966171168
          %v979 = vunpack.c.0.s8 %v978
          %v980 = vlaneseq
          %v981 = vshrl.u32 %v980, 7
          %v982 = vsub.s32 %v979, %v981
          %v983 = vrot.slane %v976, %v982
          %v985 = vsel %vm966, %v983, 0.0
          %v986 = vadd.f32 %v906, %v985
          %v987 = vstv %s330
          %v988 = vmul.f32 %v987, %v451
          %v989 = vstv %s331
          %v990 = vmul.f32 %v989, %v478
          %v991 = vstv %s332
          %v992 = vmul.f32 %v991, %v505
          %v993 = vadd.f32 %v988, %v992
          %v994 = vstv %s333
          %v995 = vmul.f32 %v994, %v410
          %v996 = vadd.f32 %v990, %v995
          %v997 = vstv %s334
          %v998 = vmul.f32 %v997, %v532
          %v999 = vadd.f32 %v993, %v998
          %v1000 = vstv %s335
          %v1001 = vmul.f32 %v1000, %v559
          %v1002 = vadd.f32 %v996, %v1001
          %v1003 = vstv %s336
          %v1004 = vmul.f32 %v1003, %v586
          %v1005 = vadd.f32 %v999, %v1004
          %v1006 = vstv %s379
          %v1007 = vmul.f32 %v1006, %v622
          %v1008 = vadd.f32 %v1002, %v1007
          %v1009 = vstv %s380
          %v1010 = vmul.f32 %v1009, %v647
          %v1011 = vadd.f32 %v1005, %v1010
          %v1012 = vstv %s381
          %v1013 = vmul.f32 %v1012, %v672
          %v1014 = vadd.f32 %v1008, %v1013
          %v1015 = vstv %s382
          %v1016 = vmul.f32 %v1015, %v411
          %v1017 = vadd.f32 %v1011, %v1016
          %v1018 = vstv %s383
          %v1019 = vmul.f32 %v1018, %v697
          %v1020 = vadd.f32 %v1014, %v1019
          %v1021 = vstv %s384
          %v1022 = vmul.f32 %v1021, %v722
          %v1023 = vadd.f32 %v1017, %v1022
          %v1024 = vstv %s385
          %v1025 = vmul.f32 %v1024, %v747
          %v1026 = vadd.f32 %v1020, %v1025
          %v1027 = vadd.f32 %v1023, %v1026
          %v1028 = vadd.f32 %v986, %v1027
          %v1029 = vstv %s337
          %v1030 = vmul.f32 %v1029, %v451
          %v1031 = vstv %s338
          %v1032 = vmul.f32 %v1031, %v478
          %v1033 = vstv %s339
          %v1034 = vmul.f32 %v1033, %v505
          %v1035 = vadd.f32 %v1030, %v1034
          %v1036 = vstv %s340
          %v1037 = vmul.f32 %v1036, %v410
          %v1038 = vadd.f32 %v1032, %v1037
          %v1039 = vstv %s341
          %v1040 = vmul.f32 %v1039, %v532
          %v1041 = vadd.f32 %v1035, %v1040
          %v1042 = vstv %s342
          %v1043 = vmul.f32 %v1042, %v559
          %v1044 = vadd.f32 %v1038, %v1043
          %v1045 = vstv %s343
          %v1046 = vmul.f32 %v1045, %v586
          %v1047 = vadd.f32 %v1041, %v1046
          %v1048 = vstv %s386
          %v1049 = vmul.f32 %v1048, %v622
          %v1050 = vadd.f32 %v1044, %v1049
          %v1051 = vstv %s387
          %v1052 = vmul.f32 %v1051, %v647
          %v1053 = vadd.f32 %v1047, %v1052
          %v1054 = vstv %s388
          %v1055 = vmul.f32 %v1054, %v672
          %v1056 = vadd.f32 %v1050, %v1055
          %v1057 = vstv %s389
          %v1058 = vmul.f32 %v1057, %v411
          %v1059 = vadd.f32 %v1053, %v1058
          %v1060 = vstv %s390
          %v1061 = vmul.f32 %v1060, %v697
          %v1062 = vadd.f32 %v1056, %v1061
          %v1063 = vstv %s391
          %v1064 = vmul.f32 %v1063, %v722
          %v1065 = vadd.f32 %v1059, %v1064
          %v1066 = vstv %s392
          %v1067 = vmul.f32 %v1066, %v747
          %v1068 = vadd.f32 %v1062, %v1067
          %v1069 = vadd.f32 %v1065, %v1068
          %v1071 = vlaneseq
          %v1072 = vshrl.u32 %v1071, 7
          %v1073 = vsub.s32 0, %v1072
          %v1074 = vrot.slane %v1069, %v1073
          %v1075 = vlaneseq
          %v1076 = vshrl.u32 %v1075, 7
          %v1077 = vsub.s32 1, %v1076
          %v1078 = vrot.slane %v1069, %v1077
          %1081 = vrot.lane.b32.xlu0 %v1074, 112
          %v1082 = vpop.permute.xlu0 %1081
          %1083 = vrot.lane.b32.xlu0 %v1078, 112
          %v1084 = vpop.permute.xlu0 %1083
          %vm1085 = vcmp.lt.s32.totalorder %v428, 112
          %v1086 = vsel %vm1085, %v1082, %v1084
          %v1087 = vsel %vm1085, %v1084, %v1082
          %vm1088 = vcmp.lt.s32.totalorder %v408, 15
          %v1091 = vcombine.low %v1086, %v1087
          %v1093 = vunpack.c.l.s4 1966171168
          %v1094 = vunpack.c.0.s8 %v1093
          %v1095 = vlaneseq
          %v1096 = vshrl.u32 %v1095, 7
          %v1097 = vsub.s32 %v1094, %v1096
          %v1098 = vrot.slane %v1091, %v1097
          %v1100 = vunpack.c.l.s4 1966171168
          %v1101 = vunpack.c.0.s8 %v1100
          %v1102 = vlaneseq
          %v1103 = vshrl.u32 %v1102, 7
          %v1104 = vsub.s32 %v1101, %v1103
          %v1105 = vrot.slane %v1098, %v1104
          %v1107 = vsel %vm1088, %v1105, 0.0
          %v1108 = vadd.f32 %v1028, %v1107
          %v1109 = vstv %s344
          %v1110 = vmul.f32 %v1109, %v451
          %v1111 = vstv %s345
          %v1112 = vmul.f32 %v1111, %v478
          %v1113 = vstv %s346
          %v1114 = vmul.f32 %v1113, %v505
          %v1115 = vadd.f32 %v1110, %v1114
          %v1116 = vstv %s347
          %v1117 = vmul.f32 %v1116, %v410
          %v1118 = vadd.f32 %v1112, %v1117
          %v1119 = vstv %s348
          %v1120 = vmul.f32 %v1119, %v532
          %v1121 = vadd.f32 %v1115, %v1120
          %v1122 = vstv %s349
          %v1123 = vmul.f32 %v1122, %v559
          %v1124 = vadd.f32 %v1118, %v1123
          %v1125 = vstv %s350
          %v1126 = vmul.f32 %v1125, %v586
          %v1127 = vadd.f32 %v1121, %v1126
          %v1128 = vstv %s393
          %v1129 = vmul.f32 %v1128, %v622
          %v1130 = vadd.f32 %v1124, %v1129
          %v1131 = vstv %s394
          %v1132 = vmul.f32 %v1131, %v647
          %v1133 = vadd.f32 %v1127, %v1132
          %v1134 = vstv %s395
          %v1135 = vmul.f32 %v1134, %v672
          %v1136 = vadd.f32 %v1130, %v1135
          %v1137 = vstv %s396
          %v1138 = vmul.f32 %v1137, %v411
          %v1139 = vadd.f32 %v1133, %v1138
          %v1140 = vstv %s397
          %v1141 = vmul.f32 %v1140, %v697
          %v1142 = vadd.f32 %v1136, %v1141
          %v1143 = vstv %s398
          %v1144 = vmul.f32 %v1143, %v722
          %v1145 = vadd.f32 %v1139, %v1144
          %v1146 = vstv %s399
          %v1147 = vmul.f32 %v1146, %v747
          %v1148 = vadd.f32 %v1142, %v1147
          %v1149 = vadd.f32 %v1145, %v1148
          %v1151 = vlaneseq
          %v1152 = vshrl.u32 %v1151, 7
          %v1153 = vsub.s32 0, %v1152
          %v1154 = vrot.slane %v1149, %v1153
          %v1155 = vlaneseq
          %v1156 = vshrl.u32 %v1155, 7
          %v1157 = vsub.s32 1, %v1156
          %v1158 = vrot.slane %v1149, %v1157
          %1161 = vrot.lane.b32.xlu0 %v1154, 96
          %v1162 = vpop.permute.xlu0 %1161
          %1163 = vrot.lane.b32.xlu0 %v1158, 96
          %v1164 = vpop.permute.xlu0 %1163
          %vm1165 = vcmp.lt.s32.totalorder %v428, 96
          %v1166 = vsel %vm1165, %v1162, %v1164
          %v1167 = vsel %vm1165, %v1164, %v1162
          %vm1168 = vcmp.lt.s32.totalorder %v408, 14
          %v1171 = vcombine.low %v1166, %v1167
          %v1173 = vunpack.c.l.s4 1966171168
          %v1174 = vunpack.c.0.s8 %v1173
          %v1175 = vlaneseq
          %v1176 = vshrl.u32 %v1175, 7
          %v1177 = vsub.s32 %v1174, %v1176
          %v1178 = vrot.slane %v1171, %v1177
          %v1180 = vunpack.c.l.s4 1966171168
          %v1181 = vunpack.c.0.s8 %v1180
          %v1182 = vlaneseq
          %v1183 = vshrl.u32 %v1182, 7
          %v1184 = vsub.s32 %v1181, %v1183
          %v1185 = vrot.slane %v1178, %v1184
          %v1187 = vsel %vm1168, %v1185, 0.0
          %v1188 = vadd.f32 %v1108, %v1187
          %v1189 = vstv %s351
          %v1190 = vmul.f32 %v1189, %v451
          %v1191 = vstv %s352
          %v1192 = vmul.f32 %v1191, %v478
          %v1193 = vstv %s353
          %v1194 = vmul.f32 %v1193, %v505
          %v1195 = vadd.f32 %v1190, %v1194
          %v1196 = vstv %s354
          %v1197 = vmul.f32 %v1196, %v410
          %v1198 = vadd.f32 %v1192, %v1197
          %v1199 = vstv %s355
          %v1200 = vmul.f32 %v1199, %v532
          %v1201 = vadd.f32 %v1195, %v1200
          %v1202 = vstv %s356
          %v1203 = vmul.f32 %v1202, %v559
          %v1204 = vadd.f32 %v1198, %v1203
          %v1205 = vstv %s357
          %v1206 = vmul.f32 %v1205, %v586
          %v1207 = vadd.f32 %v1201, %v1206
          %v1208 = vstv %s400
          %v1209 = vmul.f32 %v1208, %v622
          %v1210 = vadd.f32 %v1204, %v1209
          %v1211 = vstv %s401
          %v1212 = vmul.f32 %v1211, %v647
          %v1213 = vadd.f32 %v1207, %v1212
          %v1214 = vstv %s402
          %v1215 = vmul.f32 %v1214, %v672
          %v1216 = vadd.f32 %v1210, %v1215
          %v1217 = vstv %s403
          %v1218 = vmul.f32 %v1217, %v411
          %v1219 = vadd.f32 %v1213, %v1218
          %v1220 = vstv %s404
          %v1221 = vmul.f32 %v1220, %v697
          %v1222 = vadd.f32 %v1216, %v1221
          %v1223 = vstv %s405
          %v1224 = vmul.f32 %v1223, %v722
          %v1225 = vadd.f32 %v1219, %v1224
          %v1226 = vstv %s406
          %v1227 = vmul.f32 %v1226, %v747
          %v1228 = vadd.f32 %v1222, %v1227
          %v1229 = vadd.f32 %v1225, %v1228
          %v1231 = vlaneseq
          %v1232 = vshrl.u32 %v1231, 7
          %v1233 = vsub.s32 0, %v1232
          %v1234 = vrot.slane %v1229, %v1233
          %v1235 = vlaneseq
          %v1236 = vshrl.u32 %v1235, 7
          %v1237 = vsub.s32 1, %v1236
          %v1238 = vrot.slane %v1229, %v1237
          %1241 = vrot.lane.b32.xlu0 %v1234, 80
          %v1242 = vpop.permute.xlu0 %1241
          %1243 = vrot.lane.b32.xlu0 %v1238, 80
          %v1244 = vpop.permute.xlu0 %1243
          %vm1245 = vcmp.lt.s32.totalorder %v428, 80
          %v1246 = vsel %vm1245, %v1242, %v1244
          %v1247 = vsel %vm1245, %v1244, %v1242
          %vm1248 = vcmp.lt.s32.totalorder %v408, 13
          %v1251 = vcombine.low %v1246, %v1247
          %v1253 = vunpack.c.l.s4 1966171168
          %v1254 = vunpack.c.0.s8 %v1253
          %v1255 = vlaneseq
          %v1256 = vshrl.u32 %v1255, 7
          %v1257 = vsub.s32 %v1254, %v1256
          %v1258 = vrot.slane %v1251, %v1257
          %v1260 = vunpack.c.l.s4 1966171168
          %v1261 = vunpack.c.0.s8 %v1260
          %v1262 = vlaneseq
          %v1263 = vshrl.u32 %v1262, 7
          %v1264 = vsub.s32 %v1261, %v1263
          %v1265 = vrot.slane %v1258, %v1264
          %v1267 = vsel %vm1248, %v1265, 0.0
          %v1268 = vadd.f32 %v1188, %v1267
          %v1269 = vstv %s308
          %v1270 = vadd.f32 %v1268, %v1269
          %v1271 = vxor.u32 %v1270, 2147483648
          %v1272 = vmul.f32 %v1271, 1.442695
          %v1273 = vpow.pop %v1272
          %v1274 = vadd.f32 %v1273, 1.0
          %v1275 = vrcp.pop %v1274
          %v1276 = vmul.f32 1.0, %v1275
          %1277 = vst.msk [vmem:[%s271] sm:$0x3] %vm300, %v1276
        $region56: #{tpu_custom_call.1} parent=39 // pred_fallthru
          _
        %s1278 = sand.u32 %s156, 1
        %s1279 = scalar_lea.sflag [#allocation7], %s1278
        %s1280 = sand.u32 %s156, 1
        %s1281 = smul.addr %s1280, 2
        %s1282 = scalar_lea.vmem [#allocation10], %s1281
        // Predicated region
        $region57: #{tpu_custom_call.1} parent=39 // pred_check
          %p1283 = pneg %p166
        $region58: #{tpu_custom_call.1} parent=39 // pred_check_branch
          %1285 = sbr.rel (%p1283) target = $region60
        $region59: #{tpu_custom_call.1} parent=39 // pred_region
          %s1287 = ssub.s32 32, 32
          %1288 = vsyncadd %s1279, %s1287
          %s1289 = smul.addr %s28, 2
          %s1290 = smul.addr %s1289, 16
          %s1291 = scalar_lea.hbm %s5, %s1290
          %s1293 = sshll.u32 %s1282, 4
          %s1294 = int_to_ptr.vmem [resolvable:$true] %s1293
          %1296 = dma.vmem_to_hbm [thread:$0]  %s1294, 32, %s1291, %s1279
        $region60: #{tpu_custom_call.1} parent=39 // pred_fallthru
          _
      $region40: #{tpu_custom_call.1} parent=5 // pred_fallthru
        _
      %p1297 = scmp.le.s32.totalorder 2, %s19
      // Predicated region
      $region61: #{tpu_custom_call.1} parent=5 // pred_check
        %p1298 = pneg %p1297
      $region62: #{tpu_custom_call.1} parent=5 // pred_check_branch
        %1300 = sbr.rel (%p1298) target = $region64
      $region63: #{tpu_custom_call.1} parent=5 // pred_region
        %s1301 = ssub.s32 %s19, 2
        // Predicated region
        $region65: #{tpu_custom_call.1} parent=63 // pred_check
          %p1302 = pneg %p172
        $region66: #{tpu_custom_call.1} parent=63 // pred_check_branch
          %1304 = sbr.rel (%p1302) target = $region68
        $region67: #{tpu_custom_call.1} parent=63 // pred_region
          %s1305 = sand.u32 %s157, 1
          %s1306 = scalar_lea.sflag [#allocation7], %s1305
          %s1307 = sand.u32 %s157, 1
          %s1308 = smul.addr %s1307, 2
          %s1309 = scalar_lea.vmem [#allocation10], %s1308
          %1310 = dma.done %s1306, 32
        $region68: #{tpu_custom_call.1} parent=63 // pred_fallthru
          _
      $region64: #{tpu_custom_call.1} parent=5 // pred_fallthru
        _
    $region6: #{tpu_custom_call.1} parent=1 // loop_footer
      %s23 = sadd.s32 1, %s19
    $region7: #{tpu_custom_call.1} parent=1 // loop_footer_branch
      %18 = sbr.rel target = $region3
    $region8: #{tpu_custom_call.1} parent=1 // loop_exit
      _
    %1311 = vsyncpa [#allocation6], 1
    %s1312 = scalar_lea.sflag [#allocation6], 1
    %1313 = vsyncpa %s1312, 1
    %1314 = vsyncpa [#allocation7], 1
    %s1315 = scalar_lea.sflag [#allocation7], 1
    %1316 = vsyncpa %s1315, 1
    %1317 = vsyncpa [#allocation8], 1
    %s1318 = scalar_lea.sflag [#allocation8], 1
    %1319 = vsyncpa %s1318, 1

</llo_original>
